<compile_context>
chip_gen: v6e
topology: v6e:2x2x1
jax: 0.10.0
libtpu: 0.0.40
codegen_flags: <defaults>
</compile_context>

<pallas_src>
import functools
import math

import jax
import jax.numpy as jnp
from jax import lax
from jax.experimental import pallas as pl
from jax.experimental.pallas import tpu as pltpu

_K = 7   # conv kernel size
_P = 3   # conv padding (SAME for k=7)


def _spatial_gate_kernel(x_ref, w_ref, b_ref, o_ref, *, C, H, W):
    """Fused channel-pool -> 7x7 conv -> sigmoid -> gate for a batch tile.

    x_ref : (NB, C, H*W)  VMEM  input images, spatial flattened into lanes
    w_ref : (2*49,)       SMEM  conv weight, flat index = c*49 + i*7 + j
    b_ref : (1,)          SMEM  conv bias
    o_ref : (NB, C, H*W)  VMEM  gated output
    """
    HW = H * W
    PADF = _P * W + _P               # flat halo width, covers max |tap offset|

    x = x_ref[...].astype(jnp.float32)                       # (NB, C, HW)
    NB = x.shape[0]

    # --- ChannelPool: max & mean over channels (lane-dense) ----------------
    x_max = jnp.max(x, axis=1)                               # (NB, HW)
    x_mean = jnp.sum(x, axis=1) * (1.0 / C)                  # (NB, HW)

    # Zero-pad the flat pooled maps once.  A conv tap offset (i-3, j-3)
    # becomes a static lane slice at start = (i-3)*W + (j-3) + PADF.
    # Row (vertical) overflow lands inside the zero halo automatically;
    # column wrap across row boundaries is masked below.  Each batch row is
    # an independent image, so the per-row lane shift is exactly the 2-D tap.
    zpad = jnp.zeros((NB, PADF), jnp.float32)
    max_pad = jnp.concatenate([zpad, x_max, zpad], axis=1)    # (NB, HW + 2*PADF)
    mean_pad = jnp.concatenate([zpad, x_mean, zpad], axis=1)

    # Column-validity masks (depend on j only): valid iff 0 <= col + (j-3) < W.
    col = lax.broadcasted_iota(jnp.int32, (1, HW), 1) % W
    col_masks = []
    for j in range(_K):
        m = None
        if _P - j > 0:                       # left edge taps
            m = col >= (_P - j)
        if j > _P:                           # right edge taps
            c2 = col < (W + _P - j)
            m = c2 if m is None else jnp.logical_and(m, c2)
        col_masks.append(m)                  # None for the center column (j=3)

    # --- 7x7 conv over the 2 pooled channels: 49 scalar-weighted taps ------
    acc = jnp.zeros((NB, HW), jnp.float32)
    for i in range(_K):
        for j in range(_K):
            start = (i - _P) * W + (j - _P) + PADF
            w_max = w_ref[i * _K + j]                 # weight[0, 0, i, j]
            w_mean = w_ref[_K * _K + i * _K + j]      # weight[0, 1, i, j]
            tap = (w_max * max_pad[:, start:start + HW]
                   + w_mean * mean_pad[:, start:start + HW])  # (NB, HW)
            if col_masks[j] is not None:
                tap = jnp.where(col_masks[j], tap, 0.0)
            acc = acc + tap

    # --- sigmoid gate -------------------------------------------------------
    logits = acc + b_ref[0]
    scale = 1.0 / (1.0 + jnp.exp(-logits))            # (NB, HW)
    o_ref[...] = (x * scale[:, None, :]).astype(o_ref.dtype)  # broadcast over C


@jax.jit
def spatial_gate(x, weight, bias):
    """x: (N, C, H, W); weight: (1, 2, 7, 7) OIHW; bias: (1,)."""
    N, C, H, W = x.shape
    HW = H * W

    # Batch tile: fill the 8-deep sublane dim where possible.
    NB = 1
    for cand in (8, 4, 2, 1):
        if N % cand == 0:
            NB = cand
            break

    # Free, contiguous reshape: spatial goes to the lane dimension.
    x_flat = x.reshape(N, C, HW)
    w_flat = weight.reshape(-1).astype(jnp.float32)   # (98,): c*49 + i*7 + j
    b_flat = bias.reshape(-1).astype(jnp.float32)     # (1,)

    kernel = functools.partial(_spatial_gate_kernel, C=C, H=H, W=W)

    flops = int(N * HW * (3 * C + 4 * _K * _K + 8))   # pool + conv + gate
    bytes_accessed = int(4 * (2 * N * C * HW + w_flat.size + 1))

    out_flat = pl.pallas_call(
        kernel,
        out_shape=jax.ShapeDtypeStruct((N, C, HW), x.dtype),
        grid=(N // NB,),
        in_specs=[
            pl.BlockSpec((NB, C, HW), lambda n: (n, 0, 0)),
            pl.BlockSpec(memory_space=pltpu.MemorySpace.SMEM),
            pl.BlockSpec(memory_space=pltpu.MemorySpace.SMEM),
        ],
        out_specs=pl.BlockSpec((NB, C, HW), lambda n: (n, 0, 0)),
        compiler_params=pltpu.CompilerParams(
            dimension_semantics=("parallel",)),
        cost_estimate=pl.CostEstimate(
            flops=flops,
            transcendentals=int(N * HW),
            bytes_accessed=bytes_accessed),
    )(x_flat, w_flat, b_flat)

    return out_flat.reshape(N, C, H, W)


class SpatialGatePallas:
    """Mirrors PyTorch SpatialGate: ChannelPool + Conv2d(2,1,7,pad=3) + sigmoid gate."""

    def __init__(self, key):
        kw, kb = jax.random.split(key)
        fan_in = 2 * _K * _K
        bound = 1.0 / math.sqrt(fan_in)
        # PyTorch Conv2d(2, 1, 7) parameter layout: (Cout=1, Cin=2, 7, 7) + (1,)
        self.weight = jax.random.uniform(kw, (1, 2, _K, _K), jnp.float32,
                                         -bound, bound)
        self.bias = jax.random.uniform(kb, (1,), jnp.float32, -bound, bound)

    def __call__(self, x):
        return spatial_gate(x, self.weight, self.bias)


def _reference_forward(x, weight, bias):
    """Pure-JAX (XLA conv) reference for verification."""
    x_max = jnp.max(x, axis=1, keepdims=True)
    x_mean = jnp.mean(x, axis=1, keepdims=True)
    pooled = jnp.concatenate([x_max, x_mean], axis=1)          # (N, 2, H, W)
    y = lax.conv_general_dilated(
        pooled, weight, window_strides=(1, 1),
        padding=((_P, _P), (_P, _P)),
        dimension_numbers=("NCHW", "OIHW", "NCHW"))
    y = y + bias[None, :, None, None]
    return x * jax.nn.sigmoid(y)


if __name__ == "__main__":
    key = jax.random.PRNGKey(0)
    k_x, k_p = jax.random.split(key)

    N, C, H, W = 2, 4, 16, 16
    x = jax.random.normal(k_x, (N, C, H, W), jnp.float32)

    gate = SpatialGatePallas(k_p)
    out = jax.block_until_ready(gate(x))

    ref = jax.block_until_ready(_reference_forward(x, gate.weight, gate.bias))
    assert out.shape == (N, C, H, W)
    assert jnp.allclose(out, ref, atol=1e-4, rtol=1e-4), "mismatch vs reference"

    print("KERNEL_OK")
</pallas_src>

<mosaic_0001>
module attributes {stable_mosaic.version = 11 : i64} {
  func.func @_spatial_gate_kernel(%arg0: i32, %arg1: memref<2x4x256xf32, #tpu.memory_space<vmem>>, %arg2: memref<98xf32, #tpu.memory_space<smem>>, %arg3: memref<1xf32, #tpu.memory_space<smem>>, %arg4: memref<2x4x256xf32, #tpu.memory_space<vmem>>) attributes {dimension_semantics = [#tpu.dimension_semantics<parallel>], iteration_bounds = array<i64: 1>, scalar_prefetch = 0 : i64, scratch_operands = 0 : i64, tpu.core_type = #tpu.core_type<tc>, window_params = [{transform_indices = @transform_0, window_bounds = array<i64: 2, 4, 256>}, {transform_indices = @transform_1, window_bounds = array<i64: 98>}, {transform_indices = @transform_2, window_bounds = array<i64: 1>}, {transform_indices = @transform_3, window_bounds = array<i64: 2, 4, 256>}]} {
    %c0 = arith.constant 0 : index
    %c0_0 = arith.constant 0 : index
    %c0_1 = arith.constant 0 : index
    %0 = vector.load %arg1[%c0, %c0_0, %c0_1] : memref<2x4x256xf32, #tpu.memory_space<vmem>>, vector<2x4x256xf32>
    %cst = arith.constant dense<0xFF800000> : vector<2x256xf32>
    %1 = vector.multi_reduction <maximumf>, %0, %cst [1] : vector<2x4x256xf32> to vector<2x256xf32>
    %cst_2 = arith.constant dense<0.000000e+00> : vector<2x256xf32>
    %2 = vector.multi_reduction <add>, %0, %cst_2 [1] : vector<2x4x256xf32> to vector<2x256xf32>
    %cst_3 = arith.constant 2.500000e-01 : f32
    %3 = vector.broadcast %cst_3 : f32 to vector<2x256xf32>
    %4 = arith.mulf %2, %3 : vector<2x256xf32>
    %cst_4 = arith.constant 0.000000e+00 : f32
    %5 = vector.broadcast %cst_4 : f32 to vector<2x51xf32>
    %6 = tpu.concatenate %5, %1, %5 in 1 : vector<2x51xf32>, vector<2x256xf32>, vector<2x51xf32> -> vector<2x358xf32>
    %7 = tpu.concatenate %5, %4, %5 in 1 : vector<2x51xf32>, vector<2x256xf32>, vector<2x51xf32> -> vector<2x358xf32>
    %8 = tpu.iota {dimensions = array<i32: 1>} : vector<1x256xi32>
    %c16_i32 = arith.constant 16 : i32
    %c0_i32 = arith.constant 0 : i32
    %9 = arith.cmpi eq, %c16_i32, %c0_i32 : i32
    %c1_i32 = arith.constant 1 : i32
    %10 = arith.select %9, %c1_i32, %c16_i32 : i32
    %11 = vector.broadcast %10 : i32 to vector<1x256xi32>
    %12 = arith.remsi %8, %11 : vector<1x256xi32>
    %c0_i32_5 = arith.constant 0 : i32
    %13 = vector.broadcast %c0_i32_5 : i32 to vector<1x256xi32>
    %14 = arith.cmpi ne, %12, %13 : vector<1x256xi32>
    %c0_i32_6 = arith.constant 0 : i32
    %15 = vector.broadcast %c0_i32_6 : i32 to vector<1x256xi32>
    %16 = arith.cmpi slt, %12, %15 : vector<1x256xi32>
    %c0_i32_7 = arith.constant 0 : i32
    %17 = arith.cmpi slt, %10, %c0_i32_7 : i32
    %18 = vector.broadcast %17 : i1 to vector<1x256xi1>
    %19 = vector.broadcast %18 : vector<1x256xi1> to vector<1x256xi1>
    %20 = arith.xori %16, %19 : vector<1x256xi1>
    %21 = arith.andi %20, %14 : vector<1x256xi1>
    %22 = vector.broadcast %10 : i32 to vector<1x256xi32>
    %23 = arith.addi %12, %22 : vector<1x256xi32>
    %24 = arith.select %21, %23, %12 : vector<1x256xi1>, vector<1x256xi32>
    %c3_i32 = arith.constant 3 : i32
    %25 = vector.broadcast %c3_i32 : i32 to vector<1x256xi32>
    %26 = arith.cmpi sge, %24, %25 : vector<1x256xi32>
    %c2_i32 = arith.constant 2 : i32
    %27 = vector.broadcast %c2_i32 : i32 to vector<1x256xi32>
    %28 = arith.cmpi sge, %24, %27 : vector<1x256xi32>
    %c1_i32_8 = arith.constant 1 : i32
    %29 = vector.broadcast %c1_i32_8 : i32 to vector<1x256xi32>
    %30 = arith.cmpi sge, %24, %29 : vector<1x256xi32>
    %c15_i32 = arith.constant 15 : i32
    %31 = vector.broadcast %c15_i32 : i32 to vector<1x256xi32>
    %32 = arith.cmpi slt, %24, %31 : vector<1x256xi32>
    %c14_i32 = arith.constant 14 : i32
    %33 = vector.broadcast %c14_i32 : i32 to vector<1x256xi32>
    %34 = arith.cmpi slt, %24, %33 : vector<1x256xi32>
    %c13_i32 = arith.constant 13 : i32
    %35 = vector.broadcast %c13_i32 : i32 to vector<1x256xi32>
    %36 = arith.cmpi slt, %24, %35 : vector<1x256xi32>
    %cst_9 = arith.constant 0.000000e+00 : f32
    %37 = vector.broadcast %cst_9 : f32 to vector<2x256xf32>
    %c0_10 = arith.constant 0 : index
    %38 = memref.load %arg2[%c0_10] : memref<98xf32, #tpu.memory_space<smem>>
    %c49 = arith.constant 49 : index
    %39 = memref.load %arg2[%c49] : memref<98xf32, #tpu.memory_space<smem>>
    %40 = vector.extract_strided_slice %6 {offsets = [0, 0], sizes = [2, 256], strides = [1, 1]} : vector<2x358xf32> to vector<2x256xf32>
    %41 = vector.broadcast %38 : f32 to vector<2x256xf32>
    %42 = arith.mulf %41, %40 : vector<2x256xf32>
    %43 = vector.extract_strided_slice %7 {offsets = [0, 0], sizes = [2, 256], strides = [1, 1]} : vector<2x358xf32> to vector<2x256xf32>
    %44 = vector.broadcast %39 : f32 to vector<2x256xf32>
    %45 = arith.mulf %44, %43 : vector<2x256xf32>
    %46 = arith.addf %42, %45 : vector<2x256xf32>
    %cst_11 = arith.constant 0.000000e+00 : f32
    %47 = vector.shape_cast %26 : vector<1x256xi1> to vector<1x256xi1>
    %48 = vector.broadcast %47 : vector<1x256xi1> to vector<2x256xi1>
    %49 = vector.broadcast %cst_11 : f32 to vector<2x256xf32>
    %50 = arith.select %48, %46, %49 : vector<2x256xi1>, vector<2x256xf32>
    %51 = arith.addf %37, %50 : vector<2x256xf32>
    %c1 = arith.constant 1 : index
    %52 = memref.load %arg2[%c1] : memref<98xf32, #tpu.memory_space<smem>>
    %c50 = arith.constant 50 : index
    %53 = memref.load %arg2[%c50] : memref<98xf32, #tpu.memory_space<smem>>
    %54 = vector.extract_strided_slice %6 {offsets = [0, 1], sizes = [2, 256], strides = [1, 1]} : vector<2x358xf32> to vector<2x256xf32>
    %55 = vector.broadcast %52 : f32 to vector<2x256xf32>
    %56 = arith.mulf %55, %54 : vector<2x256xf32>
    %57 = vector.extract_strided_slice %7 {offsets = [0, 1], sizes = [2, 256], strides = [1, 1]} : vector<2x358xf32> to vector<2x256xf32>
    %58 = vector.broadcast %53 : f32 to vector<2x256xf32>
    %59 = arith.mulf %58, %57 : vector<2x256xf32>
    %60 = arith.addf %56, %59 : vector<2x256xf32>
    %cst_12 = arith.constant 0.000000e+00 : f32
    %61 = vector.shape_cast %28 : vector<1x256xi1> to vector<1x256xi1>
    %62 = vector.broadcast %61 : vector<1x256xi1> to vector<2x256xi1>
    %63 = vector.broadcast %cst_12 : f32 to vector<2x256xf32>
    %64 = arith.select %62, %60, %63 : vector<2x256xi1>, vector<2x256xf32>
    %65 = arith.addf %51, %64 : vector<2x256xf32>
    %c2 = arith.constant 2 : index
    %66 = memref.load %arg2[%c2] : memref<98xf32, #tpu.memory_space<smem>>
    %c51 = arith.constant 51 : index
    %67 = memref.load %arg2[%c51] : memref<98xf32, #tpu.memory_space<smem>>
    %68 = vector.extract_strided_slice %6 {offsets = [0, 2], sizes = [2, 256], strides = [1, 1]} : vector<2x358xf32> to vector<2x256xf32>
    %69 = vector.broadcast %66 : f32 to vector<2x256xf32>
    %70 = arith.mulf %69, %68 : vector<2x256xf32>
    %71 = vector.extract_strided_slice %7 {offsets = [0, 2], sizes = [2, 256], strides = [1, 1]} : vector<2x358xf32> to vector<2x256xf32>
    %72 = vector.broadcast %67 : f32 to vector<2x256xf32>
    %73 = arith.mulf %72, %71 : vector<2x256xf32>
    %74 = arith.addf %70, %73 : vector<2x256xf32>
    %cst_13 = arith.constant 0.000000e+00 : f32
    %75 = vector.shape_cast %30 : vector<1x256xi1> to vector<1x256xi1>
    %76 = vector.broadcast %75 : vector<1x256xi1> to vector<2x256xi1>
    %77 = vector.broadcast %cst_13 : f32 to vector<2x256xf32>
    %78 = arith.select %76, %74, %77 : vector<2x256xi1>, vector<2x256xf32>
    %79 = arith.addf %65, %78 : vector<2x256xf32>
    %c3 = arith.constant 3 : index
    %80 = memref.load %arg2[%c3] : memref<98xf32, #tpu.memory_space<smem>>
    %c52 = arith.constant 52 : index
    %81 = memref.load %arg2[%c52] : memref<98xf32, #tpu.memory_space<smem>>
    %82 = vector.extract_strided_slice %6 {offsets = [0, 3], sizes = [2, 256], strides = [1, 1]} : vector<2x358xf32> to vector<2x256xf32>
    %83 = vector.broadcast %80 : f32 to vector<2x256xf32>
    %84 = arith.mulf %83, %82 : vector<2x256xf32>
    %85 = vector.extract_strided_slice %7 {offsets = [0, 3], sizes = [2, 256], strides = [1, 1]} : vector<2x358xf32> to vector<2x256xf32>
    %86 = vector.broadcast %81 : f32 to vector<2x256xf32>
    %87 = arith.mulf %86, %85 : vector<2x256xf32>
    %88 = arith.addf %84, %87 : vector<2x256xf32>
    %89 = arith.addf %79, %88 : vector<2x256xf32>
    %c4 = arith.constant 4 : index
    %90 = memref.load %arg2[%c4] : memref<98xf32, #tpu.memory_space<smem>>
    %c53 = arith.constant 53 : index
    %91 = memref.load %arg2[%c53] : memref<98xf32, #tpu.memory_space<smem>>
    %92 = vector.extract_strided_slice %6 {offsets = [0, 4], sizes = [2, 256], strides = [1, 1]} : vector<2x358xf32> to vector<2x256xf32>
    %93 = vector.broadcast %90 : f32 to vector<2x256xf32>
    %94 = arith.mulf %93, %92 : vector<2x256xf32>
    %95 = vector.extract_strided_slice %7 {offsets = [0, 4], sizes = [2, 256], strides = [1, 1]} : vector<2x358xf32> to vector<2x256xf32>
    %96 = vector.broadcast %91 : f32 to vector<2x256xf32>
    %97 = arith.mulf %96, %95 : vector<2x256xf32>
    %98 = arith.addf %94, %97 : vector<2x256xf32>
    %cst_14 = arith.constant 0.000000e+00 : f32
    %99 = vector.shape_cast %32 : vector<1x256xi1> to vector<1x256xi1>
    %100 = vector.broadcast %99 : vector<1x256xi1> to vector<2x256xi1>
    %101 = vector.broadcast %cst_14 : f32 to vector<2x256xf32>
    %102 = arith.select %100, %98, %101 : vector<2x256xi1>, vector<2x256xf32>
    %103 = arith.addf %89, %102 : vector<2x256xf32>
    %c5 = arith.constant 5 : index
    %104 = memref.load %arg2[%c5] : memref<98xf32, #tpu.memory_space<smem>>
    %c54 = arith.constant 54 : index
    %105 = memref.load %arg2[%c54] : memref<98xf32, #tpu.memory_space<smem>>
    %106 = vector.extract_strided_slice %6 {offsets = [0, 5], sizes = [2, 256], strides = [1, 1]} : vector<2x358xf32> to vector<2x256xf32>
    %107 = vector.broadcast %104 : f32 to vector<2x256xf32>
    %108 = arith.mulf %107, %106 : vector<2x256xf32>
    %109 = vector.extract_strided_slice %7 {offsets = [0, 5], sizes = [2, 256], strides = [1, 1]} : vector<2x358xf32> to vector<2x256xf32>
    %110 = vector.broadcast %105 : f32 to vector<2x256xf32>
    %111 = arith.mulf %110, %109 : vector<2x256xf32>
    %112 = arith.addf %108, %111 : vector<2x256xf32>
    %cst_15 = arith.constant 0.000000e+00 : f32
    %113 = vector.shape_cast %34 : vector<1x256xi1> to vector<1x256xi1>
    %114 = vector.broadcast %113 : vector<1x256xi1> to vector<2x256xi1>
    %115 = vector.broadcast %cst_15 : f32 to vector<2x256xf32>
    %116 = arith.select %114, %112, %115 : vector<2x256xi1>, vector<2x256xf32>
    %117 = arith.addf %103, %116 : vector<2x256xf32>
    %c6 = arith.constant 6 : index
    %118 = memref.load %arg2[%c6] : memref<98xf32, #tpu.memory_space<smem>>
    %c55 = arith.constant 55 : index
    %119 = memref.load %arg2[%c55] : memref<98xf32, #tpu.memory_space<smem>>
    %120 = vector.extract_strided_slice %6 {offsets = [0, 6], sizes = [2, 256], strides = [1, 1]} : vector<2x358xf32> to vector<2x256xf32>
    %121 = vector.broadcast %118 : f32 to vector<2x256xf32>
    %122 = arith.mulf %121, %120 : vector<2x256xf32>
    %123 = vector.extract_strided_slice %7 {offsets = [0, 6], sizes = [2, 256], strides = [1, 1]} : vector<2x358xf32> to vector<2x256xf32>
    %124 = vector.broadcast %119 : f32 to vector<2x256xf32>
    %125 = arith.mulf %124, %123 : vector<2x256xf32>
    %126 = arith.addf %122, %125 : vector<2x256xf32>
    %cst_16 = arith.constant 0.000000e+00 : f32
    %127 = vector.shape_cast %36 : vector<1x256xi1> to vector<1x256xi1>
    %128 = vector.broadcast %127 : vector<1x256xi1> to vector<2x256xi1>
    %129 = vector.broadcast %cst_16 : f32 to vector<2x256xf32>
    %130 = arith.select %128, %126, %129 : vector<2x256xi1>, vector<2x256xf32>
    %131 = arith.addf %117, %130 : vector<2x256xf32>
    %c7 = arith.constant 7 : index
    %132 = memref.load %arg2[%c7] : memref<98xf32, #tpu.memory_space<smem>>
    %c56 = arith.constant 56 : index
    %133 = memref.load %arg2[%c56] : memref<98xf32, #tpu.memory_space<smem>>
    %134 = vector.extract_strided_slice %6 {offsets = [0, 16], sizes = [2, 256], strides = [1, 1]} : vector<2x358xf32> to vector<2x256xf32>
    %135 = vector.broadcast %132 : f32 to vector<2x256xf32>
    %136 = arith.mulf %135, %134 : vector<2x256xf32>
    %137 = vector.extract_strided_slice %7 {offsets = [0, 16], sizes = [2, 256], strides = [1, 1]} : vector<2x358xf32> to vector<2x256xf32>
    %138 = vector.broadcast %133 : f32 to vector<2x256xf32>
    %139 = arith.mulf %138, %137 : vector<2x256xf32>
    %140 = arith.addf %136, %139 : vector<2x256xf32>
    %cst_17 = arith.constant 0.000000e+00 : f32
    %141 = vector.shape_cast %26 : vector<1x256xi1> to vector<1x256xi1>
    %142 = vector.broadcast %141 : vector<1x256xi1> to vector<2x256xi1>
    %143 = vector.broadcast %cst_17 : f32 to vector<2x256xf32>
    %144 = arith.select %142, %140, %143 : vector<2x256xi1>, vector<2x256xf32>
    %145 = arith.addf %131, %144 : vector<2x256xf32>
    %c8 = arith.constant 8 : index
    %146 = memref.load %arg2[%c8] : memref<98xf32, #tpu.memory_space<smem>>
    %c57 = arith.constant 57 : index
    %147 = memref.load %arg2[%c57] : memref<98xf32, #tpu.memory_space<smem>>
    %148 = vector.extract_strided_slice %6 {offsets = [0, 17], sizes = [2, 256], strides = [1, 1]} : vector<2x358xf32> to vector<2x256xf32>
    %149 = vector.broadcast %146 : f32 to vector<2x256xf32>
    %150 = arith.mulf %149, %148 : vector<2x256xf32>
    %151 = vector.extract_strided_slice %7 {offsets = [0, 17], sizes = [2, 256], strides = [1, 1]} : vector<2x358xf32> to vector<2x256xf32>
    %152 = vector.broadcast %147 : f32 to vector<2x256xf32>
    %153 = arith.mulf %152, %151 : vector<2x256xf32>
    %154 = arith.addf %150, %153 : vector<2x256xf32>
    %cst_18 = arith.constant 0.000000e+00 : f32
    %155 = vector.shape_cast %28 : vector<1x256xi1> to vector<1x256xi1>
    %156 = vector.broadcast %155 : vector<1x256xi1> to vector<2x256xi1>
    %157 = vector.broadcast %cst_18 : f32 to vector<2x256xf32>
    %158 = arith.select %156, %154, %157 : vector<2x256xi1>, vector<2x256xf32>
    %159 = arith.addf %145, %158 : vector<2x256xf32>
    %c9 = arith.constant 9 : index
    %160 = memref.load %arg2[%c9] : memref<98xf32, #tpu.memory_space<smem>>
    %c58 = arith.constant 58 : index
    %161 = memref.load %arg2[%c58] : memref<98xf32, #tpu.memory_space<smem>>
    %162 = vector.extract_strided_slice %6 {offsets = [0, 18], sizes = [2, 256], strides = [1, 1]} : vector<2x358xf32> to vector<2x256xf32>
    %163 = vector.broadcast %160 : f32 to vector<2x256xf32>
    %164 = arith.mulf %163, %162 : vector<2x256xf32>
    %165 = vector.extract_strided_slice %7 {offsets = [0, 18], sizes = [2, 256], strides = [1, 1]} : vector<2x358xf32> to vector<2x256xf32>
    %166 = vector.broadcast %161 : f32 to vector<2x256xf32>
    %167 = arith.mulf %166, %165 : vector<2x256xf32>
    %168 = arith.addf %164, %167 : vector<2x256xf32>
    %cst_19 = arith.constant 0.000000e+00 : f32
    %169 = vector.shape_cast %30 : vector<1x256xi1> to vector<1x256xi1>
    %170 = vector.broadcast %169 : vector<1x256xi1> to vector<2x256xi1>
    %171 = vector.broadcast %cst_19 : f32 to vector<2x256xf32>
    %172 = arith.select %170, %168, %171 : vector<2x256xi1>, vector<2x256xf32>
    %173 = arith.addf %159, %172 : vector<2x256xf32>
    %c10 = arith.constant 10 : index
    %174 = memref.load %arg2[%c10] : memref<98xf32, #tpu.memory_space<smem>>
    %c59 = arith.constant 59 : index
    %175 = memref.load %arg2[%c59] : memref<98xf32, #tpu.memory_space<smem>>
    %176 = vector.extract_strided_slice %6 {offsets = [0, 19], sizes = [2, 256], strides = [1, 1]} : vector<2x358xf32> to vector<2x256xf32>
    %177 = vector.broadcast %174 : f32 to vector<2x256xf32>
    %178 = arith.mulf %177, %176 : vector<2x256xf32>
    %179 = vector.extract_strided_slice %7 {offsets = [0, 19], sizes = [2, 256], strides = [1, 1]} : vector<2x358xf32> to vector<2x256xf32>
    %180 = vector.broadcast %175 : f32 to vector<2x256xf32>
    %181 = arith.mulf %180, %179 : vector<2x256xf32>
    %182 = arith.addf %178, %181 : vector<2x256xf32>
    %183 = arith.addf %173, %182 : vector<2x256xf32>
    %c11 = arith.constant 11 : index
    %184 = memref.load %arg2[%c11] : memref<98xf32, #tpu.memory_space<smem>>
    %c60 = arith.constant 60 : index
    %185 = memref.load %arg2[%c60] : memref<98xf32, #tpu.memory_space<smem>>
    %186 = vector.extract_strided_slice %6 {offsets = [0, 20], sizes = [2, 256], strides = [1, 1]} : vector<2x358xf32> to vector<2x256xf32>
    %187 = vector.broadcast %184 : f32 to vector<2x256xf32>
    %188 = arith.mulf %187, %186 : vector<2x256xf32>
    %189 = vector.extract_strided_slice %7 {offsets = [0, 20], sizes = [2, 256], strides = [1, 1]} : vector<2x358xf32> to vector<2x256xf32>
    %190 = vector.broadcast %185 : f32 to vector<2x256xf32>
    %191 = arith.mulf %190, %189 : vector<2x256xf32>
    %192 = arith.addf %188, %191 : vector<2x256xf32>
    %cst_20 = arith.constant 0.000000e+00 : f32
    %193 = vector.shape_cast %32 : vector<1x256xi1> to vector<1x256xi1>
    %194 = vector.broadcast %193 : vector<1x256xi1> to vector<2x256xi1>
    %195 = vector.broadcast %cst_20 : f32 to vector<2x256xf32>
    %196 = arith.select %194, %192, %195 : vector<2x256xi1>, vector<2x256xf32>
    %197 = arith.addf %183, %196 : vector<2x256xf32>
    %c12 = arith.constant 12 : index
    %198 = memref.load %arg2[%c12] : memref<98xf32, #tpu.memory_space<smem>>
    %c61 = arith.constant 61 : index
    %199 = memref.load %arg2[%c61] : memref<98xf32, #tpu.memory_space<smem>>
    %200 = vector.extract_strided_slice %6 {offsets = [0, 21], sizes = [2, 256], strides = [1, 1]} : vector<2x358xf32> to vector<2x256xf32>
    %201 = vector.broadcast %198 : f32 to vector<2x256xf32>
    %202 = arith.mulf %201, %200 : vector<2x256xf32>
    %203 = vector.extract_strided_slice %7 {offsets = [0, 21], sizes = [2, 256], strides = [1, 1]} : vector<2x358xf32> to vector<2x256xf32>
    %204 = vector.broadcast %199 : f32 to vector<2x256xf32>
    %205 = arith.mulf %204, %203 : vector<2x256xf32>
    %206 = arith.addf %202, %205 : vector<2x256xf32>
    %cst_21 = arith.constant 0.000000e+00 : f32
    %207 = vector.shape_cast %34 : vector<1x256xi1> to vector<1x256xi1>
    %208 = vector.broadcast %207 : vector<1x256xi1> to vector<2x256xi1>
    %209 = vector.broadcast %cst_21 : f32 to vector<2x256xf32>
    %210 = arith.select %208, %206, %209 : vector<2x256xi1>, vector<2x256xf32>
    %211 = arith.addf %197, %210 : vector<2x256xf32>
    %c13 = arith.constant 13 : index
    %212 = memref.load %arg2[%c13] : memref<98xf32, #tpu.memory_space<smem>>
    %c62 = arith.constant 62 : index
    %213 = memref.load %arg2[%c62] : memref<98xf32, #tpu.memory_space<smem>>
    %214 = vector.extract_strided_slice %6 {offsets = [0, 22], sizes = [2, 256], strides = [1, 1]} : vector<2x358xf32> to vector<2x256xf32>
    %215 = vector.broadcast %212 : f32 to vector<2x256xf32>
    %216 = arith.mulf %215, %214 : vector<2x256xf32>
    %217 = vector.extract_strided_slice %7 {offsets = [0, 22], sizes = [2, 256], strides = [1, 1]} : vector<2x358xf32> to vector<2x256xf32>
    %218 = vector.broadcast %213 : f32 to vector<2x256xf32>
    %219 = arith.mulf %218, %217 : vector<2x256xf32>
    %220 = arith.addf %216, %219 : vector<2x256xf32>
    %cst_22 = arith.constant 0.000000e+00 : f32
    %221 = vector.shape_cast %36 : vector<1x256xi1> to vector<1x256xi1>
    %222 = vector.broadcast %221 : vector<1x256xi1> to vector<2x256xi1>
    %223 = vector.broadcast %cst_22 : f32 to vector<2x256xf32>
    %224 = arith.select %222, %220, %223 : vector<2x256xi1>, vector<2x256xf32>
    %225 = arith.addf %211, %224 : vector<2x256xf32>
    %c14 = arith.constant 14 : index
    %226 = memref.load %arg2[%c14] : memref<98xf32, #tpu.memory_space<smem>>
    %c63 = arith.constant 63 : index
    %227 = memref.load %arg2[%c63] : memref<98xf32, #tpu.memory_space<smem>>
    %228 = vector.extract_strided_slice %6 {offsets = [0, 32], sizes = [2, 256], strides = [1, 1]} : vector<2x358xf32> to vector<2x256xf32>
    %229 = vector.broadcast %226 : f32 to vector<2x256xf32>
    %230 = arith.mulf %229, %228 : vector<2x256xf32>
    %231 = vector.extract_strided_slice %7 {offsets = [0, 32], sizes = [2, 256], strides = [1, 1]} : vector<2x358xf32> to vector<2x256xf32>
    %232 = vector.broadcast %227 : f32 to vector<2x256xf32>
    %233 = arith.mulf %232, %231 : vector<2x256xf32>
    %234 = arith.addf %230, %233 : vector<2x256xf32>
    %cst_23 = arith.constant 0.000000e+00 : f32
    %235 = vector.shape_cast %26 : vector<1x256xi1> to vector<1x256xi1>
    %236 = vector.broadcast %235 : vector<1x256xi1> to vector<2x256xi1>
    %237 = vector.broadcast %cst_23 : f32 to vector<2x256xf32>
    %238 = arith.select %236, %234, %237 : vector<2x256xi1>, vector<2x256xf32>
    %239 = arith.addf %225, %238 : vector<2x256xf32>
    %c15 = arith.constant 15 : index
    %240 = memref.load %arg2[%c15] : memref<98xf32, #tpu.memory_space<smem>>
    %c64 = arith.constant 64 : index
    %241 = memref.load %arg2[%c64] : memref<98xf32, #tpu.memory_space<smem>>
    %242 = vector.extract_strided_slice %6 {offsets = [0, 33], sizes = [2, 256], strides = [1, 1]} : vector<2x358xf32> to vector<2x256xf32>
    %243 = vector.broadcast %240 : f32 to vector<2x256xf32>
    %244 = arith.mulf %243, %242 : vector<2x256xf32>
    %245 = vector.extract_strided_slice %7 {offsets = [0, 33], sizes = [2, 256], strides = [1, 1]} : vector<2x358xf32> to vector<2x256xf32>
    %246 = vector.broadcast %241 : f32 to vector<2x256xf32>
    %247 = arith.mulf %246, %245 : vector<2x256xf32>
    %248 = arith.addf %244, %247 : vector<2x256xf32>
    %cst_24 = arith.constant 0.000000e+00 : f32
    %249 = vector.shape_cast %28 : vector<1x256xi1> to vector<1x256xi1>
    %250 = vector.broadcast %249 : vector<1x256xi1> to vector<2x256xi1>
    %251 = vector.broadcast %cst_24 : f32 to vector<2x256xf32>
    %252 = arith.select %250, %248, %251 : vector<2x256xi1>, vector<2x256xf32>
    %253 = arith.addf %239, %252 : vector<2x256xf32>
    %c16 = arith.constant 16 : index
    %254 = memref.load %arg2[%c16] : memref<98xf32, #tpu.memory_space<smem>>
    %c65 = arith.constant 65 : index
    %255 = memref.load %arg2[%c65] : memref<98xf32, #tpu.memory_space<smem>>
    %256 = vector.extract_strided_slice %6 {offsets = [0, 34], sizes = [2, 256], strides = [1, 1]} : vector<2x358xf32> to vector<2x256xf32>
    %257 = vector.broadcast %254 : f32 to vector<2x256xf32>
    %258 = arith.mulf %257, %256 : vector<2x256xf32>
    %259 = vector.extract_strided_slice %7 {offsets = [0, 34], sizes = [2, 256], strides = [1, 1]} : vector<2x358xf32> to vector<2x256xf32>
    %260 = vector.broadcast %255 : f32 to vector<2x256xf32>
    %261 = arith.mulf %260, %259 : vector<2x256xf32>
    %262 = arith.addf %258, %261 : vector<2x256xf32>
    %cst_25 = arith.constant 0.000000e+00 : f32
    %263 = vector.shape_cast %30 : vector<1x256xi1> to vector<1x256xi1>
    %264 = vector.broadcast %263 : vector<1x256xi1> to vector<2x256xi1>
    %265 = vector.broadcast %cst_25 : f32 to vector<2x256xf32>
    %266 = arith.select %264, %262, %265 : vector<2x256xi1>, vector<2x256xf32>
    %267 = arith.addf %253, %266 : vector<2x256xf32>
    %c17 = arith.constant 17 : index
    %268 = memref.load %arg2[%c17] : memref<98xf32, #tpu.memory_space<smem>>
    %c66 = arith.constant 66 : index
    %269 = memref.load %arg2[%c66] : memref<98xf32, #tpu.memory_space<smem>>
    %270 = vector.extract_strided_slice %6 {offsets = [0, 35], sizes = [2, 256], strides = [1, 1]} : vector<2x358xf32> to vector<2x256xf32>
    %271 = vector.broadcast %268 : f32 to vector<2x256xf32>
    %272 = arith.mulf %271, %270 : vector<2x256xf32>
    %273 = vector.extract_strided_slice %7 {offsets = [0, 35], sizes = [2, 256], strides = [1, 1]} : vector<2x358xf32> to vector<2x256xf32>
    %274 = vector.broadcast %269 : f32 to vector<2x256xf32>
    %275 = arith.mulf %274, %273 : vector<2x256xf32>
    %276 = arith.addf %272, %275 : vector<2x256xf32>
    %277 = arith.addf %267, %276 : vector<2x256xf32>
    %c18 = arith.constant 18 : index
    %278 = memref.load %arg2[%c18] : memref<98xf32, #tpu.memory_space<smem>>
    %c67 = arith.constant 67 : index
    %279 = memref.load %arg2[%c67] : memref<98xf32, #tpu.memory_space<smem>>
    %280 = vector.extract_strided_slice %6 {offsets = [0, 36], sizes = [2, 256], strides = [1, 1]} : vector<2x358xf32> to vector<2x256xf32>
    %281 = vector.broadcast %278 : f32 to vector<2x256xf32>
    %282 = arith.mulf %281, %280 : vector<2x256xf32>
    %283 = vector.extract_strided_slice %7 {offsets = [0, 36], sizes = [2, 256], strides = [1, 1]} : vector<2x358xf32> to vector<2x256xf32>
    %284 = vector.broadcast %279 : f32 to vector<2x256xf32>
    %285 = arith.mulf %284, %283 : vector<2x256xf32>
    %286 = arith.addf %282, %285 : vector<2x256xf32>
    %cst_26 = arith.constant 0.000000e+00 : f32
    %287 = vector.shape_cast %32 : vector<1x256xi1> to vector<1x256xi1>
    %288 = vector.broadcast %287 : vector<1x256xi1> to vector<2x256xi1>
    %289 = vector.broadcast %cst_26 : f32 to vector<2x256xf32>
    %290 = arith.select %288, %286, %289 : vector<2x256xi1>, vector<2x256xf32>
    %291 = arith.addf %277, %290 : vector<2x256xf32>
    %c19 = arith.constant 19 : index
    %292 = memref.load %arg2[%c19] : memref<98xf32, #tpu.memory_space<smem>>
    %c68 = arith.constant 68 : index
    %293 = memref.load %arg2[%c68] : memref<98xf32, #tpu.memory_space<smem>>
    %294 = vector.extract_strided_slice %6 {offsets = [0, 37], sizes = [2, 256], strides = [1, 1]} : vector<2x358xf32> to vector<2x256xf32>
    %295 = vector.broadcast %292 : f32 to vector<2x256xf32>
    %296 = arith.mulf %295, %294 : vector<2x256xf32>
    %297 = vector.extract_strided_slice %7 {offsets = [0, 37], sizes = [2, 256], strides = [1, 1]} : vector<2x358xf32> to vector<2x256xf32>
    %298 = vector.broadcast %293 : f32 to vector<2x256xf32>
    %299 = arith.mulf %298, %297 : vector<2x256xf32>
    %300 = arith.addf %296, %299 : vector<2x256xf32>
    %cst_27 = arith.constant 0.000000e+00 : f32
    %301 = vector.shape_cast %34 : vector<1x256xi1> to vector<1x256xi1>
    %302 = vector.broadcast %301 : vector<1x256xi1> to vector<2x256xi1>
    %303 = vector.broadcast %cst_27 : f32 to vector<2x256xf32>
    %304 = arith.select %302, %300, %303 : vector<2x256xi1>, vector<2x256xf32>
    %305 = arith.addf %291, %304 : vector<2x256xf32>
    %c20 = arith.constant 20 : index
    %306 = memref.load %arg2[%c20] : memref<98xf32, #tpu.memory_space<smem>>
    %c69 = arith.constant 69 : index
    %307 = memref.load %arg2[%c69] : memref<98xf32, #tpu.memory_space<smem>>
    %308 = vector.extract_strided_slice %6 {offsets = [0, 38], sizes = [2, 256], strides = [1, 1]} : vector<2x358xf32> to vector<2x256xf32>
    %309 = vector.broadcast %306 : f32 to vector<2x256xf32>
    %310 = arith.mulf %309, %308 : vector<2x256xf32>
    %311 = vector.extract_strided_slice %7 {offsets = [0, 38], sizes = [2, 256], strides = [1, 1]} : vector<2x358xf32> to vector<2x256xf32>
    %312 = vector.broadcast %307 : f32 to vector<2x256xf32>
    %313 = arith.mulf %312, %311 : vector<2x256xf32>
    %314 = arith.addf %310, %313 : vector<2x256xf32>
    %cst_28 = arith.constant 0.000000e+00 : f32
    %315 = vector.shape_cast %36 : vector<1x256xi1> to vector<1x256xi1>
    %316 = vector.broadcast %315 : vector<1x256xi1> to vector<2x256xi1>
    %317 = vector.broadcast %cst_28 : f32 to vector<2x256xf32>
    %318 = arith.select %316, %314, %317 : vector<2x256xi1>, vector<2x256xf32>
    %319 = arith.addf %305, %318 : vector<2x256xf32>
    %c21 = arith.constant 21 : index
    %320 = memref.load %arg2[%c21] : memref<98xf32, #tpu.memory_space<smem>>
    %c70 = arith.constant 70 : index
    %321 = memref.load %arg2[%c70] : memref<98xf32, #tpu.memory_space<smem>>
    %322 = vector.extract_strided_slice %6 {offsets = [0, 48], sizes = [2, 256], strides = [1, 1]} : vector<2x358xf32> to vector<2x256xf32>
    %323 = vector.broadcast %320 : f32 to vector<2x256xf32>
    %324 = arith.mulf %323, %322 : vector<2x256xf32>
    %325 = vector.extract_strided_slice %7 {offsets = [0, 48], sizes = [2, 256], strides = [1, 1]} : vector<2x358xf32> to vector<2x256xf32>
    %326 = vector.broadcast %321 : f32 to vector<2x256xf32>
    %327 = arith.mulf %326, %325 : vector<2x256xf32>
    %328 = arith.addf %324, %327 : vector<2x256xf32>
    %cst_29 = arith.constant 0.000000e+00 : f32
    %329 = vector.shape_cast %26 : vector<1x256xi1> to vector<1x256xi1>
    %330 = vector.broadcast %329 : vector<1x256xi1> to vector<2x256xi1>
    %331 = vector.broadcast %cst_29 : f32 to vector<2x256xf32>
    %332 = arith.select %330, %328, %331 : vector<2x256xi1>, vector<2x256xf32>
    %333 = arith.addf %319, %332 : vector<2x256xf32>
    %c22 = arith.constant 22 : index
    %334 = memref.load %arg2[%c22] : memref<98xf32, #tpu.memory_space<smem>>
    %c71 = arith.constant 71 : index
    %335 = memref.load %arg2[%c71] : memref<98xf32, #tpu.memory_space<smem>>
    %336 = vector.extract_strided_slice %6 {offsets = [0, 49], sizes = [2, 256], strides = [1, 1]} : vector<2x358xf32> to vector<2x256xf32>
    %337 = vector.broadcast %334 : f32 to vector<2x256xf32>
    %338 = arith.mulf %337, %336 : vector<2x256xf32>
    %339 = vector.extract_strided_slice %7 {offsets = [0, 49], sizes = [2, 256], strides = [1, 1]} : vector<2x358xf32> to vector<2x256xf32>
    %340 = vector.broadcast %335 : f32 to vector<2x256xf32>
    %341 = arith.mulf %340, %339 : vector<2x256xf32>
    %342 = arith.addf %338, %341 : vector<2x256xf32>
    %cst_30 = arith.constant 0.000000e+00 : f32
    %343 = vector.shape_cast %28 : vector<1x256xi1> to vector<1x256xi1>
    %344 = vector.broadcast %343 : vector<1x256xi1> to vector<2x256xi1>
    %345 = vector.broadcast %cst_30 : f32 to vector<2x256xf32>
    %346 = arith.select %344, %342, %345 : vector<2x256xi1>, vector<2x256xf32>
    %347 = arith.addf %333, %346 : vector<2x256xf32>
    %c23 = arith.constant 23 : index
    %348 = memref.load %arg2[%c23] : memref<98xf32, #tpu.memory_space<smem>>
    %c72 = arith.constant 72 : index
    %349 = memref.load %arg2[%c72] : memref<98xf32, #tpu.memory_space<smem>>
    %350 = vector.extract_strided_slice %6 {offsets = [0, 50], sizes = [2, 256], strides = [1, 1]} : vector<2x358xf32> to vector<2x256xf32>
    %351 = vector.broadcast %348 : f32 to vector<2x256xf32>
    %352 = arith.mulf %351, %350 : vector<2x256xf32>
    %353 = vector.extract_strided_slice %7 {offsets = [0, 50], sizes = [2, 256], strides = [1, 1]} : vector<2x358xf32> to vector<2x256xf32>
    %354 = vector.broadcast %349 : f32 to vector<2x256xf32>
    %355 = arith.mulf %354, %353 : vector<2x256xf32>
    %356 = arith.addf %352, %355 : vector<2x256xf32>
    %cst_31 = arith.constant 0.000000e+00 : f32
    %357 = vector.shape_cast %30 : vector<1x256xi1> to vector<1x256xi1>
    %358 = vector.broadcast %357 : vector<1x256xi1> to vector<2x256xi1>
    %359 = vector.broadcast %cst_31 : f32 to vector<2x256xf32>
    %360 = arith.select %358, %356, %359 : vector<2x256xi1>, vector<2x256xf32>
    %361 = arith.addf %347, %360 : vector<2x256xf32>
    %c24 = arith.constant 24 : index
    %362 = memref.load %arg2[%c24] : memref<98xf32, #tpu.memory_space<smem>>
    %c73 = arith.constant 73 : index
    %363 = memref.load %arg2[%c73] : memref<98xf32, #tpu.memory_space<smem>>
    %364 = vector.extract_strided_slice %6 {offsets = [0, 51], sizes = [2, 256], strides = [1, 1]} : vector<2x358xf32> to vector<2x256xf32>
    %365 = vector.broadcast %362 : f32 to vector<2x256xf32>
    %366 = arith.mulf %365, %364 : vector<2x256xf32>
    %367 = vector.extract_strided_slice %7 {offsets = [0, 51], sizes = [2, 256], strides = [1, 1]} : vector<2x358xf32> to vector<2x256xf32>
    %368 = vector.broadcast %363 : f32 to vector<2x256xf32>
    %369 = arith.mulf %368, %367 : vector<2x256xf32>
    %370 = arith.addf %366, %369 : vector<2x256xf32>
    %371 = arith.addf %361, %370 : vector<2x256xf32>
    %c25 = arith.constant 25 : index
    %372 = memref.load %arg2[%c25] : memref<98xf32, #tpu.memory_space<smem>>
    %c74 = arith.constant 74 : index
    %373 = memref.load %arg2[%c74] : memref<98xf32, #tpu.memory_space<smem>>
    %374 = vector.extract_strided_slice %6 {offsets = [0, 52], sizes = [2, 256], strides = [1, 1]} : vector<2x358xf32> to vector<2x256xf32>
    %375 = vector.broadcast %372 : f32 to vector<2x256xf32>
    %376 = arith.mulf %375, %374 : vector<2x256xf32>
    %377 = vector.extract_strided_slice %7 {offsets = [0, 52], sizes = [2, 256], strides = [1, 1]} : vector<2x358xf32> to vector<2x256xf32>
    %378 = vector.broadcast %373 : f32 to vector<2x256xf32>
    %379 = arith.mulf %378, %377 : vector<2x256xf32>
    %380 = arith.addf %376, %379 : vector<2x256xf32>
    %cst_32 = arith.constant 0.000000e+00 : f32
    %381 = vector.shape_cast %32 : vector<1x256xi1> to vector<1x256xi1>
    %382 = vector.broadcast %381 : vector<1x256xi1> to vector<2x256xi1>
    %383 = vector.broadcast %cst_32 : f32 to vector<2x256xf32>
    %384 = arith.select %382, %380, %383 : vector<2x256xi1>, vector<2x256xf32>
    %385 = arith.addf %371, %384 : vector<2x256xf32>
    %c26 = arith.constant 26 : index
    %386 = memref.load %arg2[%c26] : memref<98xf32, #tpu.memory_space<smem>>
    %c75 = arith.constant 75 : index
    %387 = memref.load %arg2[%c75] : memref<98xf32, #tpu.memory_space<smem>>
    %388 = vector.extract_strided_slice %6 {offsets = [0, 53], sizes = [2, 256], strides = [1, 1]} : vector<2x358xf32> to vector<2x256xf32>
    %389 = vector.broadcast %386 : f32 to vector<2x256xf32>
    %390 = arith.mulf %389, %388 : vector<2x256xf32>
    %391 = vector.extract_strided_slice %7 {offsets = [0, 53], sizes = [2, 256], strides = [1, 1]} : vector<2x358xf32> to vector<2x256xf32>
    %392 = vector.broadcast %387 : f32 to vector<2x256xf32>
    %393 = arith.mulf %392, %391 : vector<2x256xf32>
    %394 = arith.addf %390, %393 : vector<2x256xf32>
    %cst_33 = arith.constant 0.000000e+00 : f32
    %395 = vector.shape_cast %34 : vector<1x256xi1> to vector<1x256xi1>
    %396 = vector.broadcast %395 : vector<1x256xi1> to vector<2x256xi1>
    %397 = vector.broadcast %cst_33 : f32 to vector<2x256xf32>
    %398 = arith.select %396, %394, %397 : vector<2x256xi1>, vector<2x256xf32>
    %399 = arith.addf %385, %398 : vector<2x256xf32>
    %c27 = arith.constant 27 : index
    %400 = memref.load %arg2[%c27] : memref<98xf32, #tpu.memory_space<smem>>
    %c76 = arith.constant 76 : index
    %401 = memref.load %arg2[%c76] : memref<98xf32, #tpu.memory_space<smem>>
    %402 = vector.extract_strided_slice %6 {offsets = [0, 54], sizes = [2, 256], strides = [1, 1]} : vector<2x358xf32> to vector<2x256xf32>
    %403 = vector.broadcast %400 : f32 to vector<2x256xf32>
    %404 = arith.mulf %403, %402 : vector<2x256xf32>
    %405 = vector.extract_strided_slice %7 {offsets = [0, 54], sizes = [2, 256], strides = [1, 1]} : vector<2x358xf32> to vector<2x256xf32>
    %406 = vector.broadcast %401 : f32 to vector<2x256xf32>
    %407 = arith.mulf %406, %405 : vector<2x256xf32>
    %408 = arith.addf %404, %407 : vector<2x256xf32>
    %cst_34 = arith.constant 0.000000e+00 : f32
    %409 = vector.shape_cast %36 : vector<1x256xi1> to vector<1x256xi1>
    %410 = vector.broadcast %409 : vector<1x256xi1> to vector<2x256xi1>
    %411 = vector.broadcast %cst_34 : f32 to vector<2x256xf32>
    %412 = arith.select %410, %408, %411 : vector<2x256xi1>, vector<2x256xf32>
    %413 = arith.addf %399, %412 : vector<2x256xf32>
    %c28 = arith.constant 28 : index
    %414 = memref.load %arg2[%c28] : memref<98xf32, #tpu.memory_space<smem>>
    %c77 = arith.constant 77 : index
    %415 = memref.load %arg2[%c77] : memref<98xf32, #tpu.memory_space<smem>>
    %416 = vector.extract_strided_slice %6 {offsets = [0, 64], sizes = [2, 256], strides = [1, 1]} : vector<2x358xf32> to vector<2x256xf32>
    %417 = vector.broadcast %414 : f32 to vector<2x256xf32>
    %418 = arith.mulf %417, %416 : vector<2x256xf32>
    %419 = vector.extract_strided_slice %7 {offsets = [0, 64], sizes = [2, 256], strides = [1, 1]} : vector<2x358xf32> to vector<2x256xf32>
    %420 = vector.broadcast %415 : f32 to vector<2x256xf32>
    %421 = arith.mulf %420, %419 : vector<2x256xf32>
    %422 = arith.addf %418, %421 : vector<2x256xf32>
    %cst_35 = arith.constant 0.000000e+00 : f32
    %423 = vector.shape_cast %26 : vector<1x256xi1> to vector<1x256xi1>
    %424 = vector.broadcast %423 : vector<1x256xi1> to vector<2x256xi1>
    %425 = vector.broadcast %cst_35 : f32 to vector<2x256xf32>
    %426 = arith.select %424, %422, %425 : vector<2x256xi1>, vector<2x256xf32>
    %427 = arith.addf %413, %426 : vector<2x256xf32>
    %c29 = arith.constant 29 : index
    %428 = memref.load %arg2[%c29] : memref<98xf32, #tpu.memory_space<smem>>
    %c78 = arith.constant 78 : index
    %429 = memref.load %arg2[%c78] : memref<98xf32, #tpu.memory_space<smem>>
    %430 = vector.extract_strided_slice %6 {offsets = [0, 65], sizes = [2, 256], strides = [1, 1]} : vector<2x358xf32> to vector<2x256xf32>
    %431 = vector.broadcast %428 : f32 to vector<2x256xf32>
    %432 = arith.mulf %431, %430 : vector<2x256xf32>
    %433 = vector.extract_strided_slice %7 {offsets = [0, 65], sizes = [2, 256], strides = [1, 1]} : vector<2x358xf32> to vector<2x256xf32>
    %434 = vector.broadcast %429 : f32 to vector<2x256xf32>
    %435 = arith.mulf %434, %433 : vector<2x256xf32>
    %436 = arith.addf %432, %435 : vector<2x256xf32>
    %cst_36 = arith.constant 0.000000e+00 : f32
    %437 = vector.shape_cast %28 : vector<1x256xi1> to vector<1x256xi1>
    %438 = vector.broadcast %437 : vector<1x256xi1> to vector<2x256xi1>
    %439 = vector.broadcast %cst_36 : f32 to vector<2x256xf32>
    %440 = arith.select %438, %436, %439 : vector<2x256xi1>, vector<2x256xf32>
    %441 = arith.addf %427, %440 : vector<2x256xf32>
    %c30 = arith.constant 30 : index
    %442 = memref.load %arg2[%c30] : memref<98xf32, #tpu.memory_space<smem>>
    %c79 = arith.constant 79 : index
    %443 = memref.load %arg2[%c79] : memref<98xf32, #tpu.memory_space<smem>>
    %444 = vector.extract_strided_slice %6 {offsets = [0, 66], sizes = [2, 256], strides = [1, 1]} : vector<2x358xf32> to vector<2x256xf32>
    %445 = vector.broadcast %442 : f32 to vector<2x256xf32>
    %446 = arith.mulf %445, %444 : vector<2x256xf32>
    %447 = vector.extract_strided_slice %7 {offsets = [0, 66], sizes = [2, 256], strides = [1, 1]} : vector<2x358xf32> to vector<2x256xf32>
    %448 = vector.broadcast %443 : f32 to vector<2x256xf32>
    %449 = arith.mulf %448, %447 : vector<2x256xf32>
    %450 = arith.addf %446, %449 : vector<2x256xf32>
    %cst_37 = arith.constant 0.000000e+00 : f32
    %451 = vector.shape_cast %30 : vector<1x256xi1> to vector<1x256xi1>
    %452 = vector.broadcast %451 : vector<1x256xi1> to vector<2x256xi1>
    %453 = vector.broadcast %cst_37 : f32 to vector<2x256xf32>
    %454 = arith.select %452, %450, %453 : vector<2x256xi1>, vector<2x256xf32>
    %455 = arith.addf %441, %454 : vector<2x256xf32>
    %c31 = arith.constant 31 : index
    %456 = memref.load %arg2[%c31] : memref<98xf32, #tpu.memory_space<smem>>
    %c80 = arith.constant 80 : index
    %457 = memref.load %arg2[%c80] : memref<98xf32, #tpu.memory_space<smem>>
    %458 = vector.extract_strided_slice %6 {offsets = [0, 67], sizes = [2, 256], strides = [1, 1]} : vector<2x358xf32> to vector<2x256xf32>
    %459 = vector.broadcast %456 : f32 to vector<2x256xf32>
    %460 = arith.mulf %459, %458 : vector<2x256xf32>
    %461 = vector.extract_strided_slice %7 {offsets = [0, 67], sizes = [2, 256], strides = [1, 1]} : vector<2x358xf32> to vector<2x256xf32>
    %462 = vector.broadcast %457 : f32 to vector<2x256xf32>
    %463 = arith.mulf %462, %461 : vector<2x256xf32>
    %464 = arith.addf %460, %463 : vector<2x256xf32>
    %465 = arith.addf %455, %464 : vector<2x256xf32>
    %c32 = arith.constant 32 : index
    %466 = memref.load %arg2[%c32] : memref<98xf32, #tpu.memory_space<smem>>
    %c81 = arith.constant 81 : index
    %467 = memref.load %arg2[%c81] : memref<98xf32, #tpu.memory_space<smem>>
    %468 = vector.extract_strided_slice %6 {offsets = [0, 68], sizes = [2, 256], strides = [1, 1]} : vector<2x358xf32> to vector<2x256xf32>
    %469 = vector.broadcast %466 : f32 to vector<2x256xf32>
    %470 = arith.mulf %469, %468 : vector<2x256xf32>
    %471 = vector.extract_strided_slice %7 {offsets = [0, 68], sizes = [2, 256], strides = [1, 1]} : vector<2x358xf32> to vector<2x256xf32>
    %472 = vector.broadcast %467 : f32 to vector<2x256xf32>
    %473 = arith.mulf %472, %471 : vector<2x256xf32>
    %474 = arith.addf %470, %473 : vector<2x256xf32>
    %cst_38 = arith.constant 0.000000e+00 : f32
    %475 = vector.shape_cast %32 : vector<1x256xi1> to vector<1x256xi1>
    %476 = vector.broadcast %475 : vector<1x256xi1> to vector<2x256xi1>
    %477 = vector.broadcast %cst_38 : f32 to vector<2x256xf32>
    %478 = arith.select %476, %474, %477 : vector<2x256xi1>, vector<2x256xf32>
    %479 = arith.addf %465, %478 : vector<2x256xf32>
    %c33 = arith.constant 33 : index
    %480 = memref.load %arg2[%c33] : memref<98xf32, #tpu.memory_space<smem>>
    %c82 = arith.constant 82 : index
    %481 = memref.load %arg2[%c82] : memref<98xf32, #tpu.memory_space<smem>>
    %482 = vector.extract_strided_slice %6 {offsets = [0, 69], sizes = [2, 256], strides = [1, 1]} : vector<2x358xf32> to vector<2x256xf32>
    %483 = vector.broadcast %480 : f32 to vector<2x256xf32>
    %484 = arith.mulf %483, %482 : vector<2x256xf32>
    %485 = vector.extract_strided_slice %7 {offsets = [0, 69], sizes = [2, 256], strides = [1, 1]} : vector<2x358xf32> to vector<2x256xf32>
    %486 = vector.broadcast %481 : f32 to vector<2x256xf32>
    %487 = arith.mulf %486, %485 : vector<2x256xf32>
    %488 = arith.addf %484, %487 : vector<2x256xf32>
    %cst_39 = arith.constant 0.000000e+00 : f32
    %489 = vector.shape_cast %34 : vector<1x256xi1> to vector<1x256xi1>
    %490 = vector.broadcast %489 : vector<1x256xi1> to vector<2x256xi1>
    %491 = vector.broadcast %cst_39 : f32 to vector<2x256xf32>
    %492 = arith.select %490, %488, %491 : vector<2x256xi1>, vector<2x256xf32>
    %493 = arith.addf %479, %492 : vector<2x256xf32>
    %c34 = arith.constant 34 : index
    %494 = memref.load %arg2[%c34] : memref<98xf32, #tpu.memory_space<smem>>
    %c83 = arith.constant 83 : index
    %495 = memref.load %arg2[%c83] : memref<98xf32, #tpu.memory_space<smem>>
    %496 = vector.extract_strided_slice %6 {offsets = [0, 70], sizes = [2, 256], strides = [1, 1]} : vector<2x358xf32> to vector<2x256xf32>
    %497 = vector.broadcast %494 : f32 to vector<2x256xf32>
    %498 = arith.mulf %497, %496 : vector<2x256xf32>
    %499 = vector.extract_strided_slice %7 {offsets = [0, 70], sizes = [2, 256], strides = [1, 1]} : vector<2x358xf32> to vector<2x256xf32>
    %500 = vector.broadcast %495 : f32 to vector<2x256xf32>
    %501 = arith.mulf %500, %499 : vector<2x256xf32>
    %502 = arith.addf %498, %501 : vector<2x256xf32>
    %cst_40 = arith.constant 0.000000e+00 : f32
    %503 = vector.shape_cast %36 : vector<1x256xi1> to vector<1x256xi1>
    %504 = vector.broadcast %503 : vector<1x256xi1> to vector<2x256xi1>
    %505 = vector.broadcast %cst_40 : f32 to vector<2x256xf32>
    %506 = arith.select %504, %502, %505 : vector<2x256xi1>, vector<2x256xf32>
    %507 = arith.addf %493, %506 : vector<2x256xf32>
    %c35 = arith.constant 35 : index
    %508 = memref.load %arg2[%c35] : memref<98xf32, #tpu.memory_space<smem>>
    %c84 = arith.constant 84 : index
    %509 = memref.load %arg2[%c84] : memref<98xf32, #tpu.memory_space<smem>>
    %510 = vector.extract_strided_slice %6 {offsets = [0, 80], sizes = [2, 256], strides = [1, 1]} : vector<2x358xf32> to vector<2x256xf32>
    %511 = vector.broadcast %508 : f32 to vector<2x256xf32>
    %512 = arith.mulf %511, %510 : vector<2x256xf32>
    %513 = vector.extract_strided_slice %7 {offsets = [0, 80], sizes = [2, 256], strides = [1, 1]} : vector<2x358xf32> to vector<2x256xf32>
    %514 = vector.broadcast %509 : f32 to vector<2x256xf32>
    %515 = arith.mulf %514, %513 : vector<2x256xf32>
    %516 = arith.addf %512, %515 : vector<2x256xf32>
    %cst_41 = arith.constant 0.000000e+00 : f32
    %517 = vector.shape_cast %26 : vector<1x256xi1> to vector<1x256xi1>
    %518 = vector.broadcast %517 : vector<1x256xi1> to vector<2x256xi1>
    %519 = vector.broadcast %cst_41 : f32 to vector<2x256xf32>
    %520 = arith.select %518, %516, %519 : vector<2x256xi1>, vector<2x256xf32>
    %521 = arith.addf %507, %520 : vector<2x256xf32>
    %c36 = arith.constant 36 : index
    %522 = memref.load %arg2[%c36] : memref<98xf32, #tpu.memory_space<smem>>
    %c85 = arith.constant 85 : index
    %523 = memref.load %arg2[%c85] : memref<98xf32, #tpu.memory_space<smem>>
    %524 = vector.extract_strided_slice %6 {offsets = [0, 81], sizes = [2, 256], strides = [1, 1]} : vector<2x358xf32> to vector<2x256xf32>
    %525 = vector.broadcast %522 : f32 to vector<2x256xf32>
    %526 = arith.mulf %525, %524 : vector<2x256xf32>
    %527 = vector.extract_strided_slice %7 {offsets = [0, 81], sizes = [2, 256], strides = [1, 1]} : vector<2x358xf32> to vector<2x256xf32>
    %528 = vector.broadcast %523 : f32 to vector<2x256xf32>
    %529 = arith.mulf %528, %527 : vector<2x256xf32>
    %530 = arith.addf %526, %529 : vector<2x256xf32>
    %cst_42 = arith.constant 0.000000e+00 : f32
    %531 = vector.shape_cast %28 : vector<1x256xi1> to vector<1x256xi1>
    %532 = vector.broadcast %531 : vector<1x256xi1> to vector<2x256xi1>
    %533 = vector.broadcast %cst_42 : f32 to vector<2x256xf32>
    %534 = arith.select %532, %530, %533 : vector<2x256xi1>, vector<2x256xf32>
    %535 = arith.addf %521, %534 : vector<2x256xf32>
    %c37 = arith.constant 37 : index
    %536 = memref.load %arg2[%c37] : memref<98xf32, #tpu.memory_space<smem>>
    %c86 = arith.constant 86 : index
    %537 = memref.load %arg2[%c86] : memref<98xf32, #tpu.memory_space<smem>>
    %538 = vector.extract_strided_slice %6 {offsets = [0, 82], sizes = [2, 256], strides = [1, 1]} : vector<2x358xf32> to vector<2x256xf32>
    %539 = vector.broadcast %536 : f32 to vector<2x256xf32>
    %540 = arith.mulf %539, %538 : vector<2x256xf32>
    %541 = vector.extract_strided_slice %7 {offsets = [0, 82], sizes = [2, 256], strides = [1, 1]} : vector<2x358xf32> to vector<2x256xf32>
    %542 = vector.broadcast %537 : f32 to vector<2x256xf32>
    %543 = arith.mulf %542, %541 : vector<2x256xf32>
    %544 = arith.addf %540, %543 : vector<2x256xf32>
    %cst_43 = arith.constant 0.000000e+00 : f32
    %545 = vector.shape_cast %30 : vector<1x256xi1> to vector<1x256xi1>
    %546 = vector.broadcast %545 : vector<1x256xi1> to vector<2x256xi1>
    %547 = vector.broadcast %cst_43 : f32 to vector<2x256xf32>
    %548 = arith.select %546, %544, %547 : vector<2x256xi1>, vector<2x256xf32>
    %549 = arith.addf %535, %548 : vector<2x256xf32>
    %c38 = arith.constant 38 : index
    %550 = memref.load %arg2[%c38] : memref<98xf32, #tpu.memory_space<smem>>
    %c87 = arith.constant 87 : index
    %551 = memref.load %arg2[%c87] : memref<98xf32, #tpu.memory_space<smem>>
    %552 = vector.extract_strided_slice %6 {offsets = [0, 83], sizes = [2, 256], strides = [1, 1]} : vector<2x358xf32> to vector<2x256xf32>
    %553 = vector.broadcast %550 : f32 to vector<2x256xf32>
    %554 = arith.mulf %553, %552 : vector<2x256xf32>
    %555 = vector.extract_strided_slice %7 {offsets = [0, 83], sizes = [2, 256], strides = [1, 1]} : vector<2x358xf32> to vector<2x256xf32>
    %556 = vector.broadcast %551 : f32 to vector<2x256xf32>
    %557 = arith.mulf %556, %555 : vector<2x256xf32>
    %558 = arith.addf %554, %557 : vector<2x256xf32>
    %559 = arith.addf %549, %558 : vector<2x256xf32>
    %c39 = arith.constant 39 : index
    %560 = memref.load %arg2[%c39] : memref<98xf32, #tpu.memory_space<smem>>
    %c88 = arith.constant 88 : index
    %561 = memref.load %arg2[%c88] : memref<98xf32, #tpu.memory_space<smem>>
    %562 = vector.extract_strided_slice %6 {offsets = [0, 84], sizes = [2, 256], strides = [1, 1]} : vector<2x358xf32> to vector<2x256xf32>
    %563 = vector.broadcast %560 : f32 to vector<2x256xf32>
    %564 = arith.mulf %563, %562 : vector<2x256xf32>
    %565 = vector.extract_strided_slice %7 {offsets = [0, 84], sizes = [2, 256], strides = [1, 1]} : vector<2x358xf32> to vector<2x256xf32>
    %566 = vector.broadcast %561 : f32 to vector<2x256xf32>
    %567 = arith.mulf %566, %565 : vector<2x256xf32>
    %568 = arith.addf %564, %567 : vector<2x256xf32>
    %cst_44 = arith.constant 0.000000e+00 : f32
    %569 = vector.shape_cast %32 : vector<1x256xi1> to vector<1x256xi1>
    %570 = vector.broadcast %569 : vector<1x256xi1> to vector<2x256xi1>
    %571 = vector.broadcast %cst_44 : f32 to vector<2x256xf32>
    %572 = arith.select %570, %568, %571 : vector<2x256xi1>, vector<2x256xf32>
    %573 = arith.addf %559, %572 : vector<2x256xf32>
    %c40 = arith.constant 40 : index
    %574 = memref.load %arg2[%c40] : memref<98xf32, #tpu.memory_space<smem>>
    %c89 = arith.constant 89 : index
    %575 = memref.load %arg2[%c89] : memref<98xf32, #tpu.memory_space<smem>>
    %576 = vector.extract_strided_slice %6 {offsets = [0, 85], sizes = [2, 256], strides = [1, 1]} : vector<2x358xf32> to vector<2x256xf32>
    %577 = vector.broadcast %574 : f32 to vector<2x256xf32>
    %578 = arith.mulf %577, %576 : vector<2x256xf32>
    %579 = vector.extract_strided_slice %7 {offsets = [0, 85], sizes = [2, 256], strides = [1, 1]} : vector<2x358xf32> to vector<2x256xf32>
    %580 = vector.broadcast %575 : f32 to vector<2x256xf32>
    %581 = arith.mulf %580, %579 : vector<2x256xf32>
    %582 = arith.addf %578, %581 : vector<2x256xf32>
    %cst_45 = arith.constant 0.000000e+00 : f32
    %583 = vector.shape_cast %34 : vector<1x256xi1> to vector<1x256xi1>
    %584 = vector.broadcast %583 : vector<1x256xi1> to vector<2x256xi1>
    %585 = vector.broadcast %cst_45 : f32 to vector<2x256xf32>
    %586 = arith.select %584, %582, %585 : vector<2x256xi1>, vector<2x256xf32>
    %587 = arith.addf %573, %586 : vector<2x256xf32>
    %c41 = arith.constant 41 : index
    %588 = memref.load %arg2[%c41] : memref<98xf32, #tpu.memory_space<smem>>
    %c90 = arith.constant 90 : index
    %589 = memref.load %arg2[%c90] : memref<98xf32, #tpu.memory_space<smem>>
    %590 = vector.extract_strided_slice %6 {offsets = [0, 86], sizes = [2, 256], strides = [1, 1]} : vector<2x358xf32> to vector<2x256xf32>
    %591 = vector.broadcast %588 : f32 to vector<2x256xf32>
    %592 = arith.mulf %591, %590 : vector<2x256xf32>
    %593 = vector.extract_strided_slice %7 {offsets = [0, 86], sizes = [2, 256], strides = [1, 1]} : vector<2x358xf32> to vector<2x256xf32>
    %594 = vector.broadcast %589 : f32 to vector<2x256xf32>
    %595 = arith.mulf %594, %593 : vector<2x256xf32>
    %596 = arith.addf %592, %595 : vector<2x256xf32>
    %cst_46 = arith.constant 0.000000e+00 : f32
    %597 = vector.shape_cast %36 : vector<1x256xi1> to vector<1x256xi1>
    %598 = vector.broadcast %597 : vector<1x256xi1> to vector<2x256xi1>
    %599 = vector.broadcast %cst_46 : f32 to vector<2x256xf32>
    %600 = arith.select %598, %596, %599 : vector<2x256xi1>, vector<2x256xf32>
    %601 = arith.addf %587, %600 : vector<2x256xf32>
    %c42 = arith.constant 42 : index
    %602 = memref.load %arg2[%c42] : memref<98xf32, #tpu.memory_space<smem>>
    %c91 = arith.constant 91 : index
    %603 = memref.load %arg2[%c91] : memref<98xf32, #tpu.memory_space<smem>>
    %604 = vector.extract_strided_slice %6 {offsets = [0, 96], sizes = [2, 256], strides = [1, 1]} : vector<2x358xf32> to vector<2x256xf32>
    %605 = vector.broadcast %602 : f32 to vector<2x256xf32>
    %606 = arith.mulf %605, %604 : vector<2x256xf32>
    %607 = vector.extract_strided_slice %7 {offsets = [0, 96], sizes = [2, 256], strides = [1, 1]} : vector<2x358xf32> to vector<2x256xf32>
    %608 = vector.broadcast %603 : f32 to vector<2x256xf32>
    %609 = arith.mulf %608, %607 : vector<2x256xf32>
    %610 = arith.addf %606, %609 : vector<2x256xf32>
    %cst_47 = arith.constant 0.000000e+00 : f32
    %611 = vector.shape_cast %26 : vector<1x256xi1> to vector<1x256xi1>
    %612 = vector.broadcast %611 : vector<1x256xi1> to vector<2x256xi1>
    %613 = vector.broadcast %cst_47 : f32 to vector<2x256xf32>
    %614 = arith.select %612, %610, %613 : vector<2x256xi1>, vector<2x256xf32>
    %615 = arith.addf %601, %614 : vector<2x256xf32>
    %c43 = arith.constant 43 : index
    %616 = memref.load %arg2[%c43] : memref<98xf32, #tpu.memory_space<smem>>
    %c92 = arith.constant 92 : index
    %617 = memref.load %arg2[%c92] : memref<98xf32, #tpu.memory_space<smem>>
    %618 = vector.extract_strided_slice %6 {offsets = [0, 97], sizes = [2, 256], strides = [1, 1]} : vector<2x358xf32> to vector<2x256xf32>
    %619 = vector.broadcast %616 : f32 to vector<2x256xf32>
    %620 = arith.mulf %619, %618 : vector<2x256xf32>
    %621 = vector.extract_strided_slice %7 {offsets = [0, 97], sizes = [2, 256], strides = [1, 1]} : vector<2x358xf32> to vector<2x256xf32>
    %622 = vector.broadcast %617 : f32 to vector<2x256xf32>
    %623 = arith.mulf %622, %621 : vector<2x256xf32>
    %624 = arith.addf %620, %623 : vector<2x256xf32>
    %cst_48 = arith.constant 0.000000e+00 : f32
    %625 = vector.shape_cast %28 : vector<1x256xi1> to vector<1x256xi1>
    %626 = vector.broadcast %625 : vector<1x256xi1> to vector<2x256xi1>
    %627 = vector.broadcast %cst_48 : f32 to vector<2x256xf32>
    %628 = arith.select %626, %624, %627 : vector<2x256xi1>, vector<2x256xf32>
    %629 = arith.addf %615, %628 : vector<2x256xf32>
    %c44 = arith.constant 44 : index
    %630 = memref.load %arg2[%c44] : memref<98xf32, #tpu.memory_space<smem>>
    %c93 = arith.constant 93 : index
    %631 = memref.load %arg2[%c93] : memref<98xf32, #tpu.memory_space<smem>>
    %632 = vector.extract_strided_slice %6 {offsets = [0, 98], sizes = [2, 256], strides = [1, 1]} : vector<2x358xf32> to vector<2x256xf32>
    %633 = vector.broadcast %630 : f32 to vector<2x256xf32>
    %634 = arith.mulf %633, %632 : vector<2x256xf32>
    %635 = vector.extract_strided_slice %7 {offsets = [0, 98], sizes = [2, 256], strides = [1, 1]} : vector<2x358xf32> to vector<2x256xf32>
    %636 = vector.broadcast %631 : f32 to vector<2x256xf32>
    %637 = arith.mulf %636, %635 : vector<2x256xf32>
    %638 = arith.addf %634, %637 : vector<2x256xf32>
    %cst_49 = arith.constant 0.000000e+00 : f32
    %639 = vector.shape_cast %30 : vector<1x256xi1> to vector<1x256xi1>
    %640 = vector.broadcast %639 : vector<1x256xi1> to vector<2x256xi1>
    %641 = vector.broadcast %cst_49 : f32 to vector<2x256xf32>
    %642 = arith.select %640, %638, %641 : vector<2x256xi1>, vector<2x256xf32>
    %643 = arith.addf %629, %642 : vector<2x256xf32>
    %c45 = arith.constant 45 : index
    %644 = memref.load %arg2[%c45] : memref<98xf32, #tpu.memory_space<smem>>
    %c94 = arith.constant 94 : index
    %645 = memref.load %arg2[%c94] : memref<98xf32, #tpu.memory_space<smem>>
    %646 = vector.extract_strided_slice %6 {offsets = [0, 99], sizes = [2, 256], strides = [1, 1]} : vector<2x358xf32> to vector<2x256xf32>
    %647 = vector.broadcast %644 : f32 to vector<2x256xf32>
    %648 = arith.mulf %647, %646 : vector<2x256xf32>
    %649 = vector.extract_strided_slice %7 {offsets = [0, 99], sizes = [2, 256], strides = [1, 1]} : vector<2x358xf32> to vector<2x256xf32>
    %650 = vector.broadcast %645 : f32 to vector<2x256xf32>
    %651 = arith.mulf %650, %649 : vector<2x256xf32>
    %652 = arith.addf %648, %651 : vector<2x256xf32>
    %653 = arith.addf %643, %652 : vector<2x256xf32>
    %c46 = arith.constant 46 : index
    %654 = memref.load %arg2[%c46] : memref<98xf32, #tpu.memory_space<smem>>
    %c95 = arith.constant 95 : index
    %655 = memref.load %arg2[%c95] : memref<98xf32, #tpu.memory_space<smem>>
    %656 = vector.extract_strided_slice %6 {offsets = [0, 100], sizes = [2, 256], strides = [1, 1]} : vector<2x358xf32> to vector<2x256xf32>
    %657 = vector.broadcast %654 : f32 to vector<2x256xf32>
    %658 = arith.mulf %657, %656 : vector<2x256xf32>
    %659 = vector.extract_strided_slice %7 {offsets = [0, 100], sizes = [2, 256], strides = [1, 1]} : vector<2x358xf32> to vector<2x256xf32>
    %660 = vector.broadcast %655 : f32 to vector<2x256xf32>
    %661 = arith.mulf %660, %659 : vector<2x256xf32>
    %662 = arith.addf %658, %661 : vector<2x256xf32>
    %cst_50 = arith.constant 0.000000e+00 : f32
    %663 = vector.shape_cast %32 : vector<1x256xi1> to vector<1x256xi1>
    %664 = vector.broadcast %663 : vector<1x256xi1> to vector<2x256xi1>
    %665 = vector.broadcast %cst_50 : f32 to vector<2x256xf32>
    %666 = arith.select %664, %662, %665 : vector<2x256xi1>, vector<2x256xf32>
    %667 = arith.addf %653, %666 : vector<2x256xf32>
    %c47 = arith.constant 47 : index
    %668 = memref.load %arg2[%c47] : memref<98xf32, #tpu.memory_space<smem>>
    %c96 = arith.constant 96 : index
    %669 = memref.load %arg2[%c96] : memref<98xf32, #tpu.memory_space<smem>>
    %670 = vector.extract_strided_slice %6 {offsets = [0, 101], sizes = [2, 256], strides = [1, 1]} : vector<2x358xf32> to vector<2x256xf32>
    %671 = vector.broadcast %668 : f32 to vector<2x256xf32>
    %672 = arith.mulf %671, %670 : vector<2x256xf32>
    %673 = vector.extract_strided_slice %7 {offsets = [0, 101], sizes = [2, 256], strides = [1, 1]} : vector<2x358xf32> to vector<2x256xf32>
    %674 = vector.broadcast %669 : f32 to vector<2x256xf32>
    %675 = arith.mulf %674, %673 : vector<2x256xf32>
    %676 = arith.addf %672, %675 : vector<2x256xf32>
    %cst_51 = arith.constant 0.000000e+00 : f32
    %677 = vector.shape_cast %34 : vector<1x256xi1> to vector<1x256xi1>
    %678 = vector.broadcast %677 : vector<1x256xi1> to vector<2x256xi1>
    %679 = vector.broadcast %cst_51 : f32 to vector<2x256xf32>
    %680 = arith.select %678, %676, %679 : vector<2x256xi1>, vector<2x256xf32>
    %681 = arith.addf %667, %680 : vector<2x256xf32>
    %c48 = arith.constant 48 : index
    %682 = memref.load %arg2[%c48] : memref<98xf32, #tpu.memory_space<smem>>
    %c97 = arith.constant 97 : index
    %683 = memref.load %arg2[%c97] : memref<98xf32, #tpu.memory_space<smem>>
    %684 = vector.extract_strided_slice %6 {offsets = [0, 102], sizes = [2, 256], strides = [1, 1]} : vector<2x358xf32> to vector<2x256xf32>
    %685 = vector.broadcast %682 : f32 to vector<2x256xf32>
    %686 = arith.mulf %685, %684 : vector<2x256xf32>
    %687 = vector.extract_strided_slice %7 {offsets = [0, 102], sizes = [2, 256], strides = [1, 1]} : vector<2x358xf32> to vector<2x256xf32>
    %688 = vector.broadcast %683 : f32 to vector<2x256xf32>
    %689 = arith.mulf %688, %687 : vector<2x256xf32>
    %690 = arith.addf %686, %689 : vector<2x256xf32>
    %cst_52 = arith.constant 0.000000e+00 : f32
    %691 = vector.shape_cast %36 : vector<1x256xi1> to vector<1x256xi1>
    %692 = vector.broadcast %691 : vector<1x256xi1> to vector<2x256xi1>
    %693 = vector.broadcast %cst_52 : f32 to vector<2x256xf32>
    %694 = arith.select %692, %690, %693 : vector<2x256xi1>, vector<2x256xf32>
    %695 = arith.addf %681, %694 : vector<2x256xf32>
    %c0_53 = arith.constant 0 : index
    %696 = memref.load %arg3[%c0_53] : memref<1xf32, #tpu.memory_space<smem>>
    %697 = vector.broadcast %696 : f32 to vector<2x256xf32>
    %698 = arith.addf %695, %697 : vector<2x256xf32>
    %cst_54 = arith.constant 0.000000e+00 : f32
    %699 = vector.broadcast %cst_54 : f32 to vector<2x256xf32>
    %700 = arith.subf %699, %698 : vector<2x256xf32>
    %701 = math.exp %700 : vector<2x256xf32>
    %cst_55 = arith.constant 1.000000e+00 : f32
    %702 = vector.broadcast %cst_55 : f32 to vector<2x256xf32>
    %703 = arith.addf %702, %701 : vector<2x256xf32>
    %cst_56 = arith.constant 1.000000e+00 : f32
    %704 = vector.broadcast %cst_56 : f32 to vector<2x256xf32>
    %705 = arith.divf %704, %703 : vector<2x256xf32>
    %706 = vector.shape_cast %705 : vector<2x256xf32> to vector<2x1x256xf32>
    %707 = vector.broadcast %706 : vector<2x1x256xf32> to vector<2x4x256xf32>
    %708 = arith.mulf %0, %707 : vector<2x4x256xf32>
    %c0_57 = arith.constant 0 : index
    %c0_58 = arith.constant 0 : index
    %c0_59 = arith.constant 0 : index
    %709 = vector.load %arg4[%c0_57, %c0_58, %c0_59] : memref<2x4x256xf32, #tpu.memory_space<vmem>>, vector<2x4x256xf32>
    tpu.vector_store %arg4[%c0_57, %c0_58, %c0_59], %708 {strides = array<i32>} : memref<2x4x256xf32, #tpu.memory_space<vmem>>, vector<2x4x256xf32>,
    return
  }
  func.func @transform_0(%arg0: i32) -> (i32, i32, i32) {
    %c0_i32 = arith.constant 0 : i32
    %c0_i32_0 = arith.constant 0 : i32
    %c0_i32_1 = arith.constant 0 : i32
    return %arg0, %c0_i32, %c0_i32_0 : i32, i32, i32
  }
  func.func @transform_1(%arg0: i32) -> i32 {
    %c0_i32 = arith.constant 0 : i32
    %c0_i32_0 = arith.constant 0 : i32
    return %c0_i32 : i32
  }
  func.func @transform_2(%arg0: i32) -> i32 {
    %c0_i32 = arith.constant 0 : i32
    %c0_i32_0 = arith.constant 0 : i32
    return %c0_i32 : i32
  }
  func.func @transform_3(%arg0: i32) -> (i32, i32, i32) {
    %c0_i32 = arith.constant 0 : i32
    %c0_i32_0 = arith.constant 0 : i32
    %c0_i32_1 = arith.constant 0 : i32
    return %arg0, %c0_i32, %c0_i32_0 : i32, i32, i32
  }
}

</mosaic_0001>

<llo_original>
// kernel: spatial_gate.1
$region0: #{spatial_gate.1}
  #allocation0 [shape = 'u32[]', space=smem, size = 0x4, offset = 0x4, fixed_abs, tag = 'smem constant byte address 0x4 - core index']
  #allocation1 [shape = 'u32[144,128]{1,0:T(1,128)}', space=vmem, size = 0x12000, scoped, tag = 'internal scratch']
  #allocation2 [shape = 'f32[1]{0:T(128)S(6)}', space=smem, size = 0x200, scoped, tag = 'scoped memory for spatial_gate.1']
  %s0 = inlined_call_operand.vmem [shape: f32[2,4,256], index: 0, kind: input, shape index: {}]
  %s1 = inlined_call_operand.vmem [shape: f32[98], index: 1, kind: input, shape index: {}]
  %s2 = inlined_call_operand.<no memory space> [shape: f32[1], index: 2, kind: input, shape index: {}]
  %s3 = inlined_call_operand.vmem [shape: f32[2,4,256], index: 3, kind: output, shape index: {}]
  %s4 = sld [smem:[#allocation0]]
  $region26: #{spatial_gate.1} parent=0
    _
  %s6 = ssub.s32 1, %s4
  %s7 = scalar_select 0, %s6, %s4
  %8 = sst [smem:[#allocation2]] %s2
  $region1: #{spatial_gate.1} parent=0
    #allocation3 [shape = 'u8[512]{0}', space=smem, size = 0x200, scoped, tag = 'input window, operand 1, single buffered']
    #allocation4 [shape = 's32[1]{0}', space=sflag, size = 0x4, scoped, tag = 'scoped memory for spatial_gate.1']
    %9 = vsyncpa [#allocation4], 0
    // Predicated region
    $region2: #{spatial_gate.1} parent=1 // pred_check
      _
    $region3: #{spatial_gate.1} parent=1 // pred_check_branch
      %11 = sbr.rel (0) target = $region5
    $region4: #{spatial_gate.1} parent=1 // pred_region
      _
    $region5: #{spatial_gate.1} parent=1 // pred_fallthru
      _
    // Predicated region
    $region6: #{spatial_gate.1} parent=1 // pred_check
      _
    $region7: #{spatial_gate.1} parent=1 // pred_check_branch
      %13 = sbr.rel (0) target = $region9
    $region8: #{spatial_gate.1} parent=1 // pred_region
      %s15 = ssub.s32 16, 16
      %16 = vsyncadd [#allocation4], %s15
      %s18 = sshll.u32 %s1, 4
      %s19 = int_to_ptr.vmem [resolvable:$true] %s18
      %21 = dma.vmem_to_smem %s19, 16, [#allocation3], [#allocation4]
    $region9: #{spatial_gate.1} parent=1 // pred_fallthru
      _
    // Predicated region
    $region10: #{spatial_gate.1} parent=1 // pred_check
      _
    $region11: #{spatial_gate.1} parent=1 // pred_check_branch
      %23 = sbr.rel (0) target = $region13
    $region12: #{spatial_gate.1} parent=1 // pred_region
      _
    $region13: #{spatial_gate.1} parent=1 // pred_fallthru
      _
    // Predicated region
    $region14: #{spatial_gate.1} parent=1 // pred_check
      _
    $region15: #{spatial_gate.1} parent=1 // pred_check_branch
      %25 = sbr.rel (0) target = $region17
    $region16: #{spatial_gate.1} parent=1 // pred_region
      %26 = dma.done [#allocation4], 16
    $region17: #{spatial_gate.1} parent=1 // pred_fallthru
      _
    %27 = sfence
    %v28 = vld [vmem:[%s0] sm:$0xff]
    %v29 = vld [vmem:[%s0 + $0x8] sm:$0xff]
    %v32 = vcombine.high %v28, %v28
    %v33 = vcombine.high %v29, %v29
    %vm36 = vcmask 1043456
    %v37 = vsel %vm36, %v28, -inf
    %v38 = vrot.slane %v37, 4
    %v39 = vmax.f32 %v37, %v38
    %v40 = vrot.slane %v39, 2
    %v41 = vmax.f32 %v39, %v40
    %v42 = vrot.slane %v41, 1
    %v43 = vmax.f32 %v41, %v42
    %v44 = vsel %vm36, %v32, -inf
    %v45 = vrot.slane %v44, 4
    %v46 = vmax.f32 %v44, %v45
    %v47 = vrot.slane %v46, 2
    %v48 = vmax.f32 %v46, %v47
    %v49 = vrot.slane %v48, 1
    %v50 = vmax.f32 %v48, %v49
    %v51 = vsel %vm36, %v29, -inf
    %v52 = vrot.slane %v51, 4
    %v53 = vmax.f32 %v51, %v52
    %v54 = vrot.slane %v53, 2
    %v55 = vmax.f32 %v53, %v54
    %v56 = vrot.slane %v55, 1
    %v57 = vmax.f32 %v55, %v56
    %v58 = vsel %vm36, %v33, -inf
    %v59 = vrot.slane %v58, 4
    %v60 = vmax.f32 %v58, %v59
    %v61 = vrot.slane %v60, 2
    %v62 = vmax.f32 %v60, %v61
    %v63 = vrot.slane %v62, 1
    %v64 = vmax.f32 %v62, %v63
    %v65 = vsel %vm36, %v28, 0.0
    %v66 = vrot.slane %v65, 4
    %v67 = vadd.f32 %v65, %v66
    %v68 = vrot.slane %v67, 2
    %v69 = vadd.f32 %v67, %v68
    %v70 = vrot.slane %v69, 1
    %v71 = vadd.f32 %v69, %v70
    %v72 = vsel %vm36, %v32, 0.0
    %v73 = vrot.slane %v72, 4
    %v74 = vadd.f32 %v72, %v73
    %v75 = vrot.slane %v74, 2
    %v76 = vadd.f32 %v74, %v75
    %v77 = vrot.slane %v76, 1
    %v78 = vadd.f32 %v76, %v77
    %v79 = vsel %vm36, %v29, 0.0
    %v80 = vrot.slane %v79, 4
    %v81 = vadd.f32 %v79, %v80
    %v82 = vrot.slane %v81, 2
    %v83 = vadd.f32 %v81, %v82
    %v84 = vrot.slane %v83, 1
    %v85 = vadd.f32 %v83, %v84
    %v86 = vsel %vm36, %v33, 0.0
    %v87 = vrot.slane %v86, 4
    %v88 = vadd.f32 %v86, %v87
    %v89 = vrot.slane %v88, 2
    %v90 = vadd.f32 %v88, %v89
    %v91 = vrot.slane %v90, 1
    %v92 = vadd.f32 %v90, %v91
    %v93 = vmul.f32 %v71, 0.25
    %v94 = vmul.f32 %v78, 0.25
    %v95 = vmul.f32 %v85, 0.25
    %v96 = vmul.f32 %v92, 0.25
    %vm101 = vcmask 1041409
    %v102 = vsel %vm101, %v57, %v43
    %v103 = vsel %vm101, %v64, %v50
    %104 = vrot.lane.b32.xlu0 %v102, 51
    %v105 = vpop.permute.xlu0 %104
    %106 = vrot.lane.b32.xlu0 %v103, 51
    %v107 = vpop.permute.xlu0 %106
    %vm108 = vcmask 416768
    %v109 = vsel %vm108, %v105, %v107
    %v113 = vsel %vm108, 0.0, %v105
    %v114 = vsel %vm108, %v107, 0.0
    %v119 = vsel %vm101, %v95, %v93
    %v120 = vsel %vm101, %v96, %v94
    %121 = vrot.lane.b32.xlu0 %v119, 51
    %v122 = vpop.permute.xlu0 %121
    %123 = vrot.lane.b32.xlu0 %v120, 51
    %v124 = vpop.permute.xlu0 %123
    %v125 = vsel %vm108, %v122, %v124
    %v129 = vsel %vm108, 0.0, %v122
    %v130 = vsel %vm108, %v124, 0.0
    %v131 = vlaneseq
    %v132 = vand.u32 %v131, 127
    %v133 = vadd.s32 %v132, 128
    %vm134 = vcmp.lt.s32.totalorder %v132, 0
    %v135 = vsub.s32 0, %v132
    %v136 = vsel %vm134, %v135, %v132
    %v137 = vshrl.u32 %v136, 4
    %v138 = vand.u32 %v136, 15
    %v139 = vsub.s32 0, %v138
    %v140 = vsel %vm134, %v139, %v138
    %vm141 = vcmp.lt.s32.totalorder %v133, 0
    %v142 = vsub.s32 0, %v133
    %v143 = vsel %vm141, %v142, %v133
    %v144 = vshrl.u32 %v143, 4
    %v145 = vand.u32 %v143, 15
    %v146 = vsub.s32 0, %v145
    %v147 = vsel %vm141, %v146, %v145
    %vm148 = vcmp.ne.s32.totalorder %v140, 0
    %vm149 = vcmp.ne.s32.totalorder %v147, 0
    %vm150 = vcmp.lt.s32.totalorder %v140, 0
    %vm151 = vcmp.lt.s32.totalorder %v147, 0
    %vm152 = vmand %vm150, %vm148
    %vm153 = vmand %vm151, %vm149
    %v154 = vadd.s32 %v140, 16
    %v155 = vadd.s32 %v147, 16
    %v156 = vsel %vm152, %v154, %v140
    %v157 = vsel %vm153, %v155, %v147
    %vm158 = vcmp.ge.s32.totalorder %v156, 3
    %vm159 = vcmp.ge.s32.totalorder %v157, 3
    %vm160 = vcmp.ge.s32.totalorder %v156, 2
    %vm161 = vcmp.ge.s32.totalorder %v157, 2
    %vm162 = vcmp.ge.s32.totalorder %v156, 1
    %vm163 = vcmp.ge.s32.totalorder %v157, 1
    %vm164 = vcmp.lt.s32.totalorder %v156, 15
    %vm165 = vcmp.lt.s32.totalorder %v157, 15
    %vm166 = vcmp.lt.s32.totalorder %v156, 14
    %vm167 = vcmp.lt.s32.totalorder %v157, 14
    %vm168 = vcmp.lt.s32.totalorder %v156, 13
    %vm169 = vcmp.lt.s32.totalorder %v157, 13
    %s170 = sld [smem:[#allocation3]]
    %s171 = sld [smem:[#allocation3 + $0x31]]
    %v172 = vstv %s170
    %v173 = vmul.f32 %v172, %v113
    %v174 = vmul.f32 %v172, %v109
    %v175 = vstv %s171
    %v176 = vmul.f32 %v175, %v129
    %v177 = vmul.f32 %v175, %v125
    %v178 = vadd.f32 %v173, %v176
    %v179 = vadd.f32 %v174, %v177
    %v180 = vsel %vm158, 1, 0
    %v181 = vsel %vm159, 1, 0
    %vm182 = vcmp.eq.s32.totalorder %v180, 1
    %vm183 = vcmp.eq.s32.totalorder %v181, 1
    %v184 = vsel %vm182, %v178, 0.0
    %v185 = vsel %vm183, %v179, 0.0
    %v186 = vadd.f32 %v184, 0.0
    %v187 = vadd.f32 %v185, 0.0
    %s188 = sld [smem:[#allocation3 + $0x1]]
    %s189 = sld [smem:[#allocation3 + $0x32]]
    %v190 = vstv %s188
    %v191 = vmul.f32 %v190, %v113
    %v192 = vmul.f32 %v190, %v109
    %v193 = vmul.f32 %v190, %v114
    %v194 = vstv %s189
    %v195 = vmul.f32 %v194, %v129
    %v196 = vmul.f32 %v194, %v125
    %v197 = vmul.f32 %v194, %v130
    %v198 = vadd.f32 %v191, %v195
    %v199 = vadd.f32 %v192, %v196
    %v200 = vadd.f32 %v193, %v197
    %v201 = vsel %vm160, 1, 0
    %v202 = vsel %vm161, 1, 0
    %vm203 = vcmp.eq.s32.totalorder %v201, 1
    %vm204 = vcmp.eq.s32.totalorder %v202, 1
    %208 = vrot.lane.b32.xlu0 %v198, 127
    %v209 = vpop.permute.xlu0 %208
    %210 = vrot.lane.b32.xlu0 %v199, 127
    %v211 = vpop.permute.xlu0 %210
    %212 = vrot.lane.b32.xlu0 %v200, 127
    %v213 = vpop.permute.xlu0 %212
    %vm214 = vcmask 1039360
    %v215 = vsel %vm214, %v209, %v211
    %v216 = vsel %vm214, %v211, %v213
    %v219 = vsel %vm203, %v215, 0.0
    %v220 = vsel %vm204, %v216, 0.0
    %v221 = vadd.f32 %v186, %v219
    %v222 = vadd.f32 %v187, %v220
    %s223 = sld [smem:[#allocation3 + $0x2]]
    %s224 = sld [smem:[#allocation3 + $0x33]]
    %v225 = vstv %s223
    %v226 = vmul.f32 %v225, %v113
    %v227 = vmul.f32 %v225, %v109
    %v228 = vmul.f32 %v225, %v114
    %v229 = vstv %s224
    %v230 = vmul.f32 %v229, %v129
    %v231 = vmul.f32 %v229, %v125
    %v232 = vmul.f32 %v229, %v130
    %v233 = vadd.f32 %v226, %v230
    %v234 = vadd.f32 %v227, %v231
    %v235 = vadd.f32 %v228, %v232
    %v236 = vsel %vm162, 1, 0
    %v237 = vsel %vm163, 1, 0
    %vm238 = vcmp.eq.s32.totalorder %v236, 1
    %vm239 = vcmp.eq.s32.totalorder %v237, 1
    %243 = vrot.lane.b32.xlu0 %v233, 126
    %v244 = vpop.permute.xlu0 %243
    %245 = vrot.lane.b32.xlu0 %v234, 126
    %v246 = vpop.permute.xlu0 %245
    %247 = vrot.lane.b32.xlu0 %v235, 126
    %v248 = vpop.permute.xlu0 %247
    %vm249 = vcmask 1031168
    %v250 = vsel %vm249, %v244, %v246
    %v251 = vsel %vm249, %v246, %v248
    %v254 = vsel %vm238, %v250, 0.0
    %v255 = vsel %vm239, %v251, 0.0
    %v256 = vadd.f32 %v221, %v254
    %v257 = vadd.f32 %v222, %v255
    %s258 = sld [smem:[#allocation3 + $0x3]]
    %s259 = sld [smem:[#allocation3 + $0x34]]
    %v260 = vstv %s258
    %v261 = vmul.f32 %v260, %v113
    %v262 = vmul.f32 %v260, %v109
    %v263 = vmul.f32 %v260, %v114
    %v264 = vstv %s259
    %v265 = vmul.f32 %v264, %v129
    %v266 = vmul.f32 %v264, %v125
    %v267 = vmul.f32 %v264, %v130
    %v268 = vadd.f32 %v261, %v265
    %v269 = vadd.f32 %v262, %v266
    %v270 = vadd.f32 %v263, %v267
    %274 = vrot.lane.b32.xlu0 %v268, 125
    %v275 = vpop.permute.xlu0 %274
    %276 = vrot.lane.b32.xlu0 %v269, 125
    %v277 = vpop.permute.xlu0 %276
    %278 = vrot.lane.b32.xlu0 %v270, 125
    %v279 = vpop.permute.xlu0 %278
    %vm280 = vcmask 1022976
    %v281 = vsel %vm280, %v275, %v277
    %v282 = vsel %vm280, %v277, %v279
    %v285 = vadd.f32 %v256, %v281
    %v286 = vadd.f32 %v257, %v282
    %s287 = sld [smem:[#allocation3 + $0x4]]
    %s288 = sld [smem:[#allocation3 + $0x35]]
    %v289 = vstv %s287
    %v290 = vmul.f32 %v289, %v113
    %v291 = vmul.f32 %v289, %v109
    %v292 = vmul.f32 %v289, %v114
    %v293 = vstv %s288
    %v294 = vmul.f32 %v293, %v129
    %v295 = vmul.f32 %v293, %v125
    %v296 = vmul.f32 %v293, %v130
    %v297 = vadd.f32 %v290, %v294
    %v298 = vadd.f32 %v291, %v295
    %v299 = vadd.f32 %v292, %v296
    %v300 = vsel %vm164, 1, 0
    %v301 = vsel %vm165, 1, 0
    %vm302 = vcmp.eq.s32.totalorder %v300, 1
    %vm303 = vcmp.eq.s32.totalorder %v301, 1
    %307 = vrot.lane.b32.xlu0 %v297, 124
    %v308 = vpop.permute.xlu0 %307
    %309 = vrot.lane.b32.xlu0 %v298, 124
    %v310 = vpop.permute.xlu0 %309
    %311 = vrot.lane.b32.xlu0 %v299, 124
    %v312 = vpop.permute.xlu0 %311
    %vm313 = vcmask 1014784
    %v314 = vsel %vm313, %v308, %v310
    %v315 = vsel %vm313, %v310, %v312
    %v318 = vsel %vm302, %v314, 0.0
    %v319 = vsel %vm303, %v315, 0.0
    %v320 = vadd.f32 %v285, %v318
    %v321 = vadd.f32 %v286, %v319
    %s322 = sld [smem:[#allocation3 + $0x5]]
    %s323 = sld [smem:[#allocation3 + $0x36]]
    %v324 = vstv %s322
    %v325 = vmul.f32 %v324, %v113
    %v326 = vmul.f32 %v324, %v109
    %v327 = vmul.f32 %v324, %v114
    %v328 = vstv %s323
    %v329 = vmul.f32 %v328, %v129
    %v330 = vmul.f32 %v328, %v125
    %v331 = vmul.f32 %v328, %v130
    %v332 = vadd.f32 %v325, %v329
    %v333 = vadd.f32 %v326, %v330
    %v334 = vadd.f32 %v327, %v331
    %v335 = vsel %vm166, 1, 0
    %v336 = vsel %vm167, 1, 0
    %vm337 = vcmp.eq.s32.totalorder %v335, 1
    %vm338 = vcmp.eq.s32.totalorder %v336, 1
    %342 = vrot.lane.b32.xlu0 %v332, 123
    %v343 = vpop.permute.xlu0 %342
    %344 = vrot.lane.b32.xlu0 %v333, 123
    %v345 = vpop.permute.xlu0 %344
    %346 = vrot.lane.b32.xlu0 %v334, 123
    %v347 = vpop.permute.xlu0 %346
    %vm348 = vcmask 1006592
    %v349 = vsel %vm348, %v343, %v345
    %v350 = vsel %vm348, %v345, %v347
    %v353 = vsel %vm337, %v349, 0.0
    %v354 = vsel %vm338, %v350, 0.0
    %v355 = vadd.f32 %v320, %v353
    %v356 = vadd.f32 %v321, %v354
    %s357 = sld [smem:[#allocation3 + $0x6]]
    %s358 = sld [smem:[#allocation3 + $0x37]]
    %v359 = vstv %s357
    %v360 = vmul.f32 %v359, %v113
    %v361 = vmul.f32 %v359, %v109
    %v362 = vmul.f32 %v359, %v114
    %v363 = vstv %s358
    %v364 = vmul.f32 %v363, %v129
    %v365 = vmul.f32 %v363, %v125
    %v366 = vmul.f32 %v363, %v130
    %v367 = vadd.f32 %v360, %v364
    %v368 = vadd.f32 %v361, %v365
    %v369 = vadd.f32 %v362, %v366
    %v370 = vsel %vm168, 1, 0
    %v371 = vsel %vm169, 1, 0
    %vm372 = vcmp.eq.s32.totalorder %v370, 1
    %vm373 = vcmp.eq.s32.totalorder %v371, 1
    %377 = vrot.lane.b32.xlu0 %v367, 122
    %v378 = vpop.permute.xlu0 %377
    %379 = vrot.lane.b32.xlu0 %v368, 122
    %v380 = vpop.permute.xlu0 %379
    %381 = vrot.lane.b32.xlu0 %v369, 122
    %v382 = vpop.permute.xlu0 %381
    %vm383 = vcmask 998400
    %v384 = vsel %vm383, %v378, %v380
    %v385 = vsel %vm383, %v380, %v382
    %v388 = vsel %vm372, %v384, 0.0
    %v389 = vsel %vm373, %v385, 0.0
    %v390 = vadd.f32 %v355, %v388
    %v391 = vadd.f32 %v356, %v389
    %s392 = sld [smem:[#allocation3 + $0x7]]
    %s393 = sld [smem:[#allocation3 + $0x38]]
    %v394 = vstv %s392
    %v395 = vmul.f32 %v394, %v113
    %v396 = vmul.f32 %v394, %v109
    %v397 = vmul.f32 %v394, %v114
    %v398 = vstv %s393
    %v399 = vmul.f32 %v398, %v129
    %v400 = vmul.f32 %v398, %v125
    %v401 = vmul.f32 %v398, %v130
    %v402 = vadd.f32 %v395, %v399
    %v403 = vadd.f32 %v396, %v400
    %v404 = vadd.f32 %v397, %v401
    %408 = vrot.lane.b32.xlu0 %v402, 112
    %v409 = vpop.permute.xlu0 %408
    %410 = vrot.lane.b32.xlu0 %v403, 112
    %v411 = vpop.permute.xlu0 %410
    %412 = vrot.lane.b32.xlu0 %v404, 112
    %v413 = vpop.permute.xlu0 %412
    %vm414 = vcmask 916480
    %v415 = vsel %vm414, %v409, %v411
    %v416 = vsel %vm414, %v411, %v413
    %v419 = vsel %vm182, %v415, 0.0
    %v420 = vsel %vm183, %v416, 0.0
    %v421 = vadd.f32 %v390, %v419
    %v422 = vadd.f32 %v391, %v420
    %s423 = sld [smem:[#allocation3 + $0x8]]
    %s424 = sld [smem:[#allocation3 + $0x39]]
    %v425 = vstv %s423
    %v426 = vmul.f32 %v425, %v113
    %v427 = vmul.f32 %v425, %v109
    %v428 = vmul.f32 %v425, %v114
    %v429 = vstv %s424
    %v430 = vmul.f32 %v429, %v129
    %v431 = vmul.f32 %v429, %v125
    %v432 = vmul.f32 %v429, %v130
    %v433 = vadd.f32 %v426, %v430
    %v434 = vadd.f32 %v427, %v431
    %v435 = vadd.f32 %v428, %v432
    %439 = vrot.lane.b32.xlu0 %v433, 111
    %v440 = vpop.permute.xlu0 %439
    %441 = vrot.lane.b32.xlu0 %v434, 111
    %v442 = vpop.permute.xlu0 %441
    %443 = vrot.lane.b32.xlu0 %v435, 111
    %v444 = vpop.permute.xlu0 %443
    %vm445 = vcmask 908288
    %v446 = vsel %vm445, %v440, %v442
    %v447 = vsel %vm445, %v442, %v444
    %v450 = vsel %vm203, %v446, 0.0
    %v451 = vsel %vm204, %v447, 0.0
    %v452 = vadd.f32 %v421, %v450
    %v453 = vadd.f32 %v422, %v451
    %s454 = sld [smem:[#allocation3 + $0x9]]
    %s455 = sld [smem:[#allocation3 + $0x3a]]
    %v456 = vstv %s454
    %v457 = vmul.f32 %v456, %v113
    %v458 = vmul.f32 %v456, %v109
    %v459 = vmul.f32 %v456, %v114
    %v460 = vstv %s455
    %v461 = vmul.f32 %v460, %v129
    %v462 = vmul.f32 %v460, %v125
    %v463 = vmul.f32 %v460, %v130
    %v464 = vadd.f32 %v457, %v461
    %v465 = vadd.f32 %v458, %v462
    %v466 = vadd.f32 %v459, %v463
    %470 = vrot.lane.b32.xlu0 %v464, 110
    %v471 = vpop.permute.xlu0 %470
    %472 = vrot.lane.b32.xlu0 %v465, 110
    %v473 = vpop.permute.xlu0 %472
    %474 = vrot.lane.b32.xlu0 %v466, 110
    %v475 = vpop.permute.xlu0 %474
    %vm476 = vcmask 900096
    %v477 = vsel %vm476, %v471, %v473
    %v478 = vsel %vm476, %v473, %v475
    %v481 = vsel %vm238, %v477, 0.0
    %v482 = vsel %vm239, %v478, 0.0
    %v483 = vadd.f32 %v452, %v481
    %v484 = vadd.f32 %v453, %v482
    %s485 = sld [smem:[#allocation3 + $0xa]]
    %s486 = sld [smem:[#allocation3 + $0x3b]]
    %v487 = vstv %s485
    %v488 = vmul.f32 %v487, %v113
    %v489 = vmul.f32 %v487, %v109
    %v490 = vmul.f32 %v487, %v114
    %v491 = vstv %s486
    %v492 = vmul.f32 %v491, %v129
    %v493 = vmul.f32 %v491, %v125
    %v494 = vmul.f32 %v491, %v130
    %v495 = vadd.f32 %v488, %v492
    %v496 = vadd.f32 %v489, %v493
    %v497 = vadd.f32 %v490, %v494
    %501 = vrot.lane.b32.xlu0 %v495, 109
    %v502 = vpop.permute.xlu0 %501
    %503 = vrot.lane.b32.xlu0 %v496, 109
    %v504 = vpop.permute.xlu0 %503
    %505 = vrot.lane.b32.xlu0 %v497, 109
    %v506 = vpop.permute.xlu0 %505
    %vm507 = vcmask 891904
    %v508 = vsel %vm507, %v502, %v504
    %v509 = vsel %vm507, %v504, %v506
    %v512 = vadd.f32 %v483, %v508
    %v513 = vadd.f32 %v484, %v509
    %s514 = sld [smem:[#allocation3 + $0xb]]
    %s515 = sld [smem:[#allocation3 + $0x3c]]
    %v516 = vstv %s514
    %v517 = vmul.f32 %v516, %v113
    %v518 = vmul.f32 %v516, %v109
    %v519 = vmul.f32 %v516, %v114
    %v520 = vstv %s515
    %v521 = vmul.f32 %v520, %v129
    %v522 = vmul.f32 %v520, %v125
    %v523 = vmul.f32 %v520, %v130
    %v524 = vadd.f32 %v517, %v521
    %v525 = vadd.f32 %v518, %v522
    %v526 = vadd.f32 %v519, %v523
    %530 = vrot.lane.b32.xlu0 %v524, 108
    %v531 = vpop.permute.xlu0 %530
    %532 = vrot.lane.b32.xlu0 %v525, 108
    %v533 = vpop.permute.xlu0 %532
    %534 = vrot.lane.b32.xlu0 %v526, 108
    %v535 = vpop.permute.xlu0 %534
    %vm536 = vcmask 883712
    %v537 = vsel %vm536, %v531, %v533
    %v538 = vsel %vm536, %v533, %v535
    %v541 = vsel %vm302, %v537, 0.0
    %v542 = vsel %vm303, %v538, 0.0
    %v543 = vadd.f32 %v512, %v541
    %v544 = vadd.f32 %v513, %v542
    %s545 = sld [smem:[#allocation3 + $0xc]]
    %s546 = sld [smem:[#allocation3 + $0x3d]]
    %v547 = vstv %s545
    %v548 = vmul.f32 %v547, %v113
    %v549 = vmul.f32 %v547, %v109
    %v550 = vmul.f32 %v547, %v114
    %v551 = vstv %s546
    %v552 = vmul.f32 %v551, %v129
    %v553 = vmul.f32 %v551, %v125
    %v554 = vmul.f32 %v551, %v130
    %v555 = vadd.f32 %v548, %v552
    %v556 = vadd.f32 %v549, %v553
    %v557 = vadd.f32 %v550, %v554
    %561 = vrot.lane.b32.xlu0 %v555, 107
    %v562 = vpop.permute.xlu0 %561
    %563 = vrot.lane.b32.xlu0 %v556, 107
    %v564 = vpop.permute.xlu0 %563
    %565 = vrot.lane.b32.xlu0 %v557, 107
    %v566 = vpop.permute.xlu0 %565
    %vm567 = vcmask 875520
    %v568 = vsel %vm567, %v562, %v564
    %v569 = vsel %vm567, %v564, %v566
    %v572 = vsel %vm337, %v568, 0.0
    %v573 = vsel %vm338, %v569, 0.0
    %v574 = vadd.f32 %v543, %v572
    %v575 = vadd.f32 %v544, %v573
    %s576 = sld [smem:[#allocation3 + $0xd]]
    %s577 = sld [smem:[#allocation3 + $0x3e]]
    %v578 = vstv %s576
    %v579 = vmul.f32 %v578, %v113
    %v580 = vmul.f32 %v578, %v109
    %v581 = vmul.f32 %v578, %v114
    %v582 = vstv %s577
    %v583 = vmul.f32 %v582, %v129
    %v584 = vmul.f32 %v582, %v125
    %v585 = vmul.f32 %v582, %v130
    %v586 = vadd.f32 %v579, %v583
    %v587 = vadd.f32 %v580, %v584
    %v588 = vadd.f32 %v581, %v585
    %592 = vrot.lane.b32.xlu0 %v586, 106
    %v593 = vpop.permute.xlu0 %592
    %594 = vrot.lane.b32.xlu0 %v587, 106
    %v595 = vpop.permute.xlu0 %594
    %596 = vrot.lane.b32.xlu0 %v588, 106
    %v597 = vpop.permute.xlu0 %596
    %vm598 = vcmask 867328
    %v599 = vsel %vm598, %v593, %v595
    %v600 = vsel %vm598, %v595, %v597
    %v603 = vsel %vm372, %v599, 0.0
    %v604 = vsel %vm373, %v600, 0.0
    %v605 = vadd.f32 %v574, %v603
    %v606 = vadd.f32 %v575, %v604
    %s607 = sld [smem:[#allocation3 + $0xe]]
    %s608 = sld [smem:[#allocation3 + $0x3f]]
    %v609 = vstv %s607
    %v610 = vmul.f32 %v609, %v113
    %v611 = vmul.f32 %v609, %v109
    %v612 = vmul.f32 %v609, %v114
    %v613 = vstv %s608
    %v614 = vmul.f32 %v613, %v129
    %v615 = vmul.f32 %v613, %v125
    %v616 = vmul.f32 %v613, %v130
    %v617 = vadd.f32 %v610, %v614
    %v618 = vadd.f32 %v611, %v615
    %v619 = vadd.f32 %v612, %v616
    %623 = vrot.lane.b32.xlu0 %v617, 96
    %v624 = vpop.permute.xlu0 %623
    %625 = vrot.lane.b32.xlu0 %v618, 96
    %v626 = vpop.permute.xlu0 %625
    %627 = vrot.lane.b32.xlu0 %v619, 96
    %v628 = vpop.permute.xlu0 %627
    %vm629 = vcmask 785408
    %v630 = vsel %vm629, %v624, %v626
    %v631 = vsel %vm629, %v626, %v628
    %v634 = vsel %vm182, %v630, 0.0
    %v635 = vsel %vm183, %v631, 0.0
    %v636 = vadd.f32 %v605, %v634
    %v637 = vadd.f32 %v606, %v635
    %s638 = sld [smem:[#allocation3 + $0xf]]
    %s639 = sld [smem:[#allocation3 + $0x40]]
    %v640 = vstv %s638
    %v641 = vmul.f32 %v640, %v113
    %v642 = vmul.f32 %v640, %v109
    %v643 = vmul.f32 %v640, %v114
    %v644 = vstv %s639
    %v645 = vmul.f32 %v644, %v129
    %v646 = vmul.f32 %v644, %v125
    %v647 = vmul.f32 %v644, %v130
    %v648 = vadd.f32 %v641, %v645
    %v649 = vadd.f32 %v642, %v646
    %v650 = vadd.f32 %v643, %v647
    %654 = vrot.lane.b32.xlu0 %v648, 95
    %v655 = vpop.permute.xlu0 %654
    %656 = vrot.lane.b32.xlu0 %v649, 95
    %v657 = vpop.permute.xlu0 %656
    %658 = vrot.lane.b32.xlu0 %v650, 95
    %v659 = vpop.permute.xlu0 %658
    %vm660 = vcmask 777216
    %v661 = vsel %vm660, %v655, %v657
    %v662 = vsel %vm660, %v657, %v659
    %v665 = vsel %vm203, %v661, 0.0
    %v666 = vsel %vm204, %v662, 0.0
    %v667 = vadd.f32 %v636, %v665
    %v668 = vadd.f32 %v637, %v666
    %s669 = sld [smem:[#allocation3 + $0x10]]
    %s670 = sld [smem:[#allocation3 + $0x41]]
    %v671 = vstv %s669
    %v672 = vmul.f32 %v671, %v113
    %v673 = vmul.f32 %v671, %v109
    %v674 = vmul.f32 %v671, %v114
    %v675 = vstv %s670
    %v676 = vmul.f32 %v675, %v129
    %v677 = vmul.f32 %v675, %v125
    %v678 = vmul.f32 %v675, %v130
    %v679 = vadd.f32 %v672, %v676
    %v680 = vadd.f32 %v673, %v677
    %v681 = vadd.f32 %v674, %v678
    %685 = vrot.lane.b32.xlu0 %v679, 94
    %v686 = vpop.permute.xlu0 %685
    %687 = vrot.lane.b32.xlu0 %v680, 94
    %v688 = vpop.permute.xlu0 %687
    %689 = vrot.lane.b32.xlu0 %v681, 94
    %v690 = vpop.permute.xlu0 %689
    %vm691 = vcmask 769024
    %v692 = vsel %vm691, %v686, %v688
    %v693 = vsel %vm691, %v688, %v690
    %v696 = vsel %vm238, %v692, 0.0
    %v697 = vsel %vm239, %v693, 0.0
    %v698 = vadd.f32 %v667, %v696
    %v699 = vadd.f32 %v668, %v697
    %s700 = sld [smem:[#allocation3 + $0x11]]
    %s701 = sld [smem:[#allocation3 + $0x42]]
    %v702 = vstv %s700
    %v703 = vmul.f32 %v702, %v113
    %v704 = vmul.f32 %v702, %v109
    %v705 = vmul.f32 %v702, %v114
    %v706 = vstv %s701
    %v707 = vmul.f32 %v706, %v129
    %v708 = vmul.f32 %v706, %v125
    %v709 = vmul.f32 %v706, %v130
    %v710 = vadd.f32 %v703, %v707
    %v711 = vadd.f32 %v704, %v708
    %v712 = vadd.f32 %v705, %v709
    %716 = vrot.lane.b32.xlu0 %v710, 93
    %v717 = vpop.permute.xlu0 %716
    %718 = vrot.lane.b32.xlu0 %v711, 93
    %v719 = vpop.permute.xlu0 %718
    %720 = vrot.lane.b32.xlu0 %v712, 93
    %v721 = vpop.permute.xlu0 %720
    %vm722 = vcmask 760832
    %v723 = vsel %vm722, %v717, %v719
    %v724 = vsel %vm722, %v719, %v721
    %v727 = vadd.f32 %v698, %v723
    %v728 = vadd.f32 %v699, %v724
    %s729 = sld [smem:[#allocation3 + $0x12]]
    %s730 = sld [smem:[#allocation3 + $0x43]]
    %v731 = vstv %s729
    %v732 = vmul.f32 %v731, %v113
    %v733 = vmul.f32 %v731, %v109
    %v734 = vmul.f32 %v731, %v114
    %v735 = vstv %s730
    %v736 = vmul.f32 %v735, %v129
    %v737 = vmul.f32 %v735, %v125
    %v738 = vmul.f32 %v735, %v130
    %v739 = vadd.f32 %v732, %v736
    %v740 = vadd.f32 %v733, %v737
    %v741 = vadd.f32 %v734, %v738
    %745 = vrot.lane.b32.xlu0 %v739, 92
    %v746 = vpop.permute.xlu0 %745
    %747 = vrot.lane.b32.xlu0 %v740, 92
    %v748 = vpop.permute.xlu0 %747
    %749 = vrot.lane.b32.xlu0 %v741, 92
    %v750 = vpop.permute.xlu0 %749
    %vm751 = vcmask 752640
    %v752 = vsel %vm751, %v746, %v748
    %v753 = vsel %vm751, %v748, %v750
    %v756 = vsel %vm302, %v752, 0.0
    %v757 = vsel %vm303, %v753, 0.0
    %v758 = vadd.f32 %v727, %v756
    %v759 = vadd.f32 %v728, %v757
    %s760 = sld [smem:[#allocation3 + $0x13]]
    %s761 = sld [smem:[#allocation3 + $0x44]]
    %v762 = vstv %s760
    %v763 = vmul.f32 %v762, %v113
    %v764 = vmul.f32 %v762, %v109
    %v765 = vmul.f32 %v762, %v114
    %v766 = vstv %s761
    %v767 = vmul.f32 %v766, %v129
    %v768 = vmul.f32 %v766, %v125
    %v769 = vmul.f32 %v766, %v130
    %v770 = vadd.f32 %v763, %v767
    %v771 = vadd.f32 %v764, %v768
    %v772 = vadd.f32 %v765, %v769
    %776 = vrot.lane.b32.xlu0 %v770, 91
    %v777 = vpop.permute.xlu0 %776
    %778 = vrot.lane.b32.xlu0 %v771, 91
    %v779 = vpop.permute.xlu0 %778
    %780 = vrot.lane.b32.xlu0 %v772, 91
    %v781 = vpop.permute.xlu0 %780
    %vm782 = vcmask 744448
    %v783 = vsel %vm782, %v777, %v779
    %v784 = vsel %vm782, %v779, %v781
    %v787 = vsel %vm337, %v783, 0.0
    %v788 = vsel %vm338, %v784, 0.0
    %v789 = vadd.f32 %v758, %v787
    %v790 = vadd.f32 %v759, %v788
    %s791 = sld [smem:[#allocation3 + $0x14]]
    %s792 = sld [smem:[#allocation3 + $0x45]]
    %v793 = vstv %s791
    %v794 = vmul.f32 %v793, %v113
    %v795 = vmul.f32 %v793, %v109
    %v796 = vmul.f32 %v793, %v114
    %v797 = vstv %s792
    %v798 = vmul.f32 %v797, %v129
    %v799 = vmul.f32 %v797, %v125
    %v800 = vmul.f32 %v797, %v130
    %v801 = vadd.f32 %v794, %v798
    %v802 = vadd.f32 %v795, %v799
    %v803 = vadd.f32 %v796, %v800
    %807 = vrot.lane.b32.xlu0 %v801, 90
    %v808 = vpop.permute.xlu0 %807
    %809 = vrot.lane.b32.xlu0 %v802, 90
    %v810 = vpop.permute.xlu0 %809
    %811 = vrot.lane.b32.xlu0 %v803, 90
    %v812 = vpop.permute.xlu0 %811
    %vm813 = vcmask 736256
    %v814 = vsel %vm813, %v808, %v810
    %v815 = vsel %vm813, %v810, %v812
    %v818 = vsel %vm372, %v814, 0.0
    %v819 = vsel %vm373, %v815, 0.0
    %v820 = vadd.f32 %v789, %v818
    %v821 = vadd.f32 %v790, %v819
    %s822 = sld [smem:[#allocation3 + $0x15]]
    %s823 = sld [smem:[#allocation3 + $0x46]]
    %v824 = vstv %s822
    %v825 = vmul.f32 %v824, %v113
    %v826 = vmul.f32 %v824, %v109
    %v827 = vmul.f32 %v824, %v114
    %v828 = vstv %s823
    %v829 = vmul.f32 %v828, %v129
    %v830 = vmul.f32 %v828, %v125
    %v831 = vmul.f32 %v828, %v130
    %v832 = vadd.f32 %v825, %v829
    %v833 = vadd.f32 %v826, %v830
    %v834 = vadd.f32 %v827, %v831
    %838 = vrot.lane.b32.xlu0 %v832, 80
    %v839 = vpop.permute.xlu0 %838
    %840 = vrot.lane.b32.xlu0 %v833, 80
    %v841 = vpop.permute.xlu0 %840
    %842 = vrot.lane.b32.xlu0 %v834, 80
    %v843 = vpop.permute.xlu0 %842
    %vm844 = vcmask 654336
    %v845 = vsel %vm844, %v839, %v841
    %v846 = vsel %vm844, %v841, %v843
    %v849 = vsel %vm182, %v845, 0.0
    %v850 = vsel %vm183, %v846, 0.0
    %v851 = vadd.f32 %v820, %v849
    %v852 = vadd.f32 %v821, %v850
    %s853 = sld [smem:[#allocation3 + $0x16]]
    %s854 = sld [smem:[#allocation3 + $0x47]]
    %v855 = vstv %s853
    %v856 = vmul.f32 %v855, %v113
    %v857 = vmul.f32 %v855, %v109
    %v858 = vmul.f32 %v855, %v114
    %v859 = vstv %s854
    %v860 = vmul.f32 %v859, %v129
    %v861 = vmul.f32 %v859, %v125
    %v862 = vmul.f32 %v859, %v130
    %v863 = vadd.f32 %v856, %v860
    %v864 = vadd.f32 %v857, %v861
    %v865 = vadd.f32 %v858, %v862
    %869 = vrot.lane.b32.xlu0 %v863, 79
    %v870 = vpop.permute.xlu0 %869
    %871 = vrot.lane.b32.xlu0 %v864, 79
    %v872 = vpop.permute.xlu0 %871
    %873 = vrot.lane.b32.xlu0 %v865, 79
    %v874 = vpop.permute.xlu0 %873
    %vm875 = vcmask 646144
    %v876 = vsel %vm875, %v870, %v872
    %v877 = vsel %vm875, %v872, %v874
    %v880 = vsel %vm203, %v876, 0.0
    %v881 = vsel %vm204, %v877, 0.0
    %v882 = vadd.f32 %v851, %v880
    %v883 = vadd.f32 %v852, %v881
    %s884 = sld [smem:[#allocation3 + $0x17]]
    %s885 = sld [smem:[#allocation3 + $0x48]]
    %v886 = vstv %s884
    %v887 = vmul.f32 %v886, %v113
    %v888 = vmul.f32 %v886, %v109
    %v889 = vmul.f32 %v886, %v114
    %v890 = vstv %s885
    %v891 = vmul.f32 %v890, %v129
    %v892 = vmul.f32 %v890, %v125
    %v893 = vmul.f32 %v890, %v130
    %v894 = vadd.f32 %v887, %v891
    %v895 = vadd.f32 %v888, %v892
    %v896 = vadd.f32 %v889, %v893
    %900 = vrot.lane.b32.xlu0 %v894, 78
    %v901 = vpop.permute.xlu0 %900
    %902 = vrot.lane.b32.xlu0 %v895, 78
    %v903 = vpop.permute.xlu0 %902
    %904 = vrot.lane.b32.xlu0 %v896, 78
    %v905 = vpop.permute.xlu0 %904
    %vm906 = vcmask 637952
    %v907 = vsel %vm906, %v901, %v903
    %v908 = vsel %vm906, %v903, %v905
    %v911 = vsel %vm238, %v907, 0.0
    %v912 = vsel %vm239, %v908, 0.0
    %v913 = vadd.f32 %v882, %v911
    %v914 = vadd.f32 %v883, %v912
    %s915 = sld [smem:[#allocation3 + $0x18]]
    %s916 = sld [smem:[#allocation3 + $0x49]]
    %v917 = vstv %s915
    %v918 = vmul.f32 %v917, %v113
    %v919 = vmul.f32 %v917, %v109
    %v920 = vmul.f32 %v917, %v114
    %v921 = vstv %s916
    %v922 = vmul.f32 %v921, %v129
    %v923 = vmul.f32 %v921, %v125
    %v924 = vmul.f32 %v921, %v130
    %v925 = vadd.f32 %v918, %v922
    %v926 = vadd.f32 %v919, %v923
    %v927 = vadd.f32 %v920, %v924
    %931 = vrot.lane.b32.xlu0 %v925, 77
    %v932 = vpop.permute.xlu0 %931
    %933 = vrot.lane.b32.xlu0 %v926, 77
    %v934 = vpop.permute.xlu0 %933
    %935 = vrot.lane.b32.xlu0 %v927, 77
    %v936 = vpop.permute.xlu0 %935
    %vm937 = vcmask 629760
    %v938 = vsel %vm937, %v932, %v934
    %v939 = vsel %vm937, %v934, %v936
    %v942 = vadd.f32 %v913, %v938
    %v943 = vadd.f32 %v914, %v939
    %s944 = sld [smem:[#allocation3 + $0x19]]
    %s945 = sld [smem:[#allocation3 + $0x4a]]
    %v946 = vstv %s944
    %v947 = vmul.f32 %v946, %v113
    %v948 = vmul.f32 %v946, %v109
    %v949 = vmul.f32 %v946, %v114
    %v950 = vstv %s945
    %v951 = vmul.f32 %v950, %v129
    %v952 = vmul.f32 %v950, %v125
    %v953 = vmul.f32 %v950, %v130
    %v954 = vadd.f32 %v947, %v951
    %v955 = vadd.f32 %v948, %v952
    %v956 = vadd.f32 %v949, %v953
    %960 = vrot.lane.b32.xlu0 %v954, 76
    %v961 = vpop.permute.xlu0 %960
    %962 = vrot.lane.b32.xlu0 %v955, 76
    %v963 = vpop.permute.xlu0 %962
    %964 = vrot.lane.b32.xlu0 %v956, 76
    %v965 = vpop.permute.xlu0 %964
    %vm966 = vcmask 621568
    %v967 = vsel %vm966, %v961, %v963
    %v968 = vsel %vm966, %v963, %v965
    %v971 = vsel %vm302, %v967, 0.0
    %v972 = vsel %vm303, %v968, 0.0
    %v973 = vadd.f32 %v942, %v971
    %v974 = vadd.f32 %v943, %v972
    %s975 = sld [smem:[#allocation3 + $0x1a]]
    %s976 = sld [smem:[#allocation3 + $0x4b]]
    %v977 = vstv %s975
    %v978 = vmul.f32 %v977, %v113
    %v979 = vmul.f32 %v977, %v109
    %v980 = vmul.f32 %v977, %v114
    %v981 = vstv %s976
    %v982 = vmul.f32 %v981, %v129
    %v983 = vmul.f32 %v981, %v125
    %v984 = vmul.f32 %v981, %v130
    %v985 = vadd.f32 %v978, %v982
    %v986 = vadd.f32 %v979, %v983
    %v987 = vadd.f32 %v980, %v984
    %991 = vrot.lane.b32.xlu0 %v985, 75
    %v992 = vpop.permute.xlu0 %991
    %993 = vrot.lane.b32.xlu0 %v986, 75
    %v994 = vpop.permute.xlu0 %993
    %995 = vrot.lane.b32.xlu0 %v987, 75
    %v996 = vpop.permute.xlu0 %995
    %vm997 = vcmask 613376
    %v998 = vsel %vm997, %v992, %v994
    %v999 = vsel %vm997, %v994, %v996
    %v1002 = vsel %vm337, %v998, 0.0
    %v1003 = vsel %vm338, %v999, 0.0
    %v1004 = vadd.f32 %v973, %v1002
    %v1005 = vadd.f32 %v974, %v1003
    %s1006 = sld [smem:[#allocation3 + $0x1b]]
    %s1007 = sld [smem:[#allocation3 + $0x4c]]
    %v1008 = vstv %s1006
    %v1009 = vmul.f32 %v1008, %v113
    %v1010 = vmul.f32 %v1008, %v109
    %v1011 = vmul.f32 %v1008, %v114
    %v1012 = vstv %s1007
    %v1013 = vmul.f32 %v1012, %v129
    %v1014 = vmul.f32 %v1012, %v125
    %v1015 = vmul.f32 %v1012, %v130
    %v1016 = vadd.f32 %v1009, %v1013
    %v1017 = vadd.f32 %v1010, %v1014
    %v1018 = vadd.f32 %v1011, %v1015
    %1022 = vrot.lane.b32.xlu0 %v1016, 74
    %v1023 = vpop.permute.xlu0 %1022
    %1024 = vrot.lane.b32.xlu0 %v1017, 74
    %v1025 = vpop.permute.xlu0 %1024
    %1026 = vrot.lane.b32.xlu0 %v1018, 74
    %v1027 = vpop.permute.xlu0 %1026
    %vm1028 = vcmask 605184
    %v1029 = vsel %vm1028, %v1023, %v1025
    %v1030 = vsel %vm1028, %v1025, %v1027
    %v1033 = vsel %vm372, %v1029, 0.0
    %v1034 = vsel %vm373, %v1030, 0.0
    %v1035 = vadd.f32 %v1004, %v1033
    %v1036 = vadd.f32 %v1005, %v1034
    %s1037 = sld [smem:[#allocation3 + $0x1c]]
    %s1038 = sld [smem:[#allocation3 + $0x4d]]
    %v1039 = vstv %s1037
    %v1040 = vmul.f32 %v1039, %v113
    %v1041 = vmul.f32 %v1039, %v109
    %v1042 = vmul.f32 %v1039, %v114
    %v1043 = vstv %s1038
    %v1044 = vmul.f32 %v1043, %v129
    %v1045 = vmul.f32 %v1043, %v125
    %v1046 = vmul.f32 %v1043, %v130
    %v1047 = vadd.f32 %v1040, %v1044
    %v1048 = vadd.f32 %v1041, %v1045
    %v1049 = vadd.f32 %v1042, %v1046
    %1053 = vrot.lane.b32.xlu0 %v1047, 64
    %v1054 = vpop.permute.xlu0 %1053
    %1055 = vrot.lane.b32.xlu0 %v1048, 64
    %v1056 = vpop.permute.xlu0 %1055
    %1057 = vrot.lane.b32.xlu0 %v1049, 64
    %v1058 = vpop.permute.xlu0 %1057
    %vm1059 = vcmask 523264
    %v1060 = vsel %vm1059, %v1054, %v1056
    %v1061 = vsel %vm1059, %v1056, %v1058
    %v1064 = vsel %vm182, %v1060, 0.0
    %v1065 = vsel %vm183, %v1061, 0.0
    %v1066 = vadd.f32 %v1035, %v1064
    %v1067 = vadd.f32 %v1036, %v1065
    %s1068 = sld [smem:[#allocation3 + $0x1d]]
    %s1069 = sld [smem:[#allocation3 + $0x4e]]
    %v1070 = vstv %s1068
    %v1071 = vmul.f32 %v1070, %v113
    %v1072 = vmul.f32 %v1070, %v109
    %v1073 = vmul.f32 %v1070, %v114
    %v1074 = vstv %s1069
    %v1075 = vmul.f32 %v1074, %v129
    %v1076 = vmul.f32 %v1074, %v125
    %v1077 = vmul.f32 %v1074, %v130
    %v1078 = vadd.f32 %v1071, %v1075
    %v1079 = vadd.f32 %v1072, %v1076
    %v1080 = vadd.f32 %v1073, %v1077
    %1084 = vrot.lane.b32.xlu0 %v1078, 63
    %v1085 = vpop.permute.xlu0 %1084
    %1086 = vrot.lane.b32.xlu0 %v1079, 63
    %v1087 = vpop.permute.xlu0 %1086
    %1088 = vrot.lane.b32.xlu0 %v1080, 63
    %v1089 = vpop.permute.xlu0 %1088
    %vm1090 = vcmask 515072
    %v1091 = vsel %vm1090, %v1085, %v1087
    %v1092 = vsel %vm1090, %v1087, %v1089
    %v1095 = vsel %vm203, %v1091, 0.0
    %v1096 = vsel %vm204, %v1092, 0.0
    %v1097 = vadd.f32 %v1066, %v1095
    %v1098 = vadd.f32 %v1067, %v1096
    %s1099 = sld [smem:[#allocation3 + $0x1e]]
    %s1100 = sld [smem:[#allocation3 + $0x4f]]
    %v1101 = vstv %s1099
    %v1102 = vmul.f32 %v1101, %v113
    %v1103 = vmul.f32 %v1101, %v109
    %v1104 = vmul.f32 %v1101, %v114
    %v1105 = vstv %s1100
    %v1106 = vmul.f32 %v1105, %v129
    %v1107 = vmul.f32 %v1105, %v125
    %v1108 = vmul.f32 %v1105, %v130
    %v1109 = vadd.f32 %v1102, %v1106
    %v1110 = vadd.f32 %v1103, %v1107
    %v1111 = vadd.f32 %v1104, %v1108
    %1115 = vrot.lane.b32.xlu0 %v1109, 62
    %v1116 = vpop.permute.xlu0 %1115
    %1117 = vrot.lane.b32.xlu0 %v1110, 62
    %v1118 = vpop.permute.xlu0 %1117
    %1119 = vrot.lane.b32.xlu0 %v1111, 62
    %v1120 = vpop.permute.xlu0 %1119
    %vm1121 = vcmask 506880
    %v1122 = vsel %vm1121, %v1116, %v1118
    %v1123 = vsel %vm1121, %v1118, %v1120
    %v1126 = vsel %vm238, %v1122, 0.0
    %v1127 = vsel %vm239, %v1123, 0.0
    %v1128 = vadd.f32 %v1097, %v1126
    %v1129 = vadd.f32 %v1098, %v1127
    %s1130 = sld [smem:[#allocation3 + $0x1f]]
    %s1131 = sld [smem:[#allocation3 + $0x50]]
    %v1132 = vstv %s1130
    %v1133 = vmul.f32 %v1132, %v113
    %v1134 = vmul.f32 %v1132, %v109
    %v1135 = vmul.f32 %v1132, %v114
    %v1136 = vstv %s1131
    %v1137 = vmul.f32 %v1136, %v129
    %v1138 = vmul.f32 %v1136, %v125
    %v1139 = vmul.f32 %v1136, %v130
    %v1140 = vadd.f32 %v1133, %v1137
    %v1141 = vadd.f32 %v1134, %v1138
    %v1142 = vadd.f32 %v1135, %v1139
    %1146 = vrot.lane.b32.xlu0 %v1140, 61
    %v1147 = vpop.permute.xlu0 %1146
    %1148 = vrot.lane.b32.xlu0 %v1141, 61
    %v1149 = vpop.permute.xlu0 %1148
    %1150 = vrot.lane.b32.xlu0 %v1142, 61
    %v1151 = vpop.permute.xlu0 %1150
    %vm1152 = vcmask 498688
    %v1153 = vsel %vm1152, %v1147, %v1149
    %v1154 = vsel %vm1152, %v1149, %v1151
    %v1157 = vadd.f32 %v1128, %v1153
    %v1158 = vadd.f32 %v1129, %v1154
    %s1159 = sld [smem:[#allocation3 + $0x20]]
    %s1160 = sld [smem:[#allocation3 + $0x51]]
    %v1161 = vstv %s1159
    %v1162 = vmul.f32 %v1161, %v113
    %v1163 = vmul.f32 %v1161, %v109
    %v1164 = vmul.f32 %v1161, %v114
    %v1165 = vstv %s1160
    %v1166 = vmul.f32 %v1165, %v129
    %v1167 = vmul.f32 %v1165, %v125
    %v1168 = vmul.f32 %v1165, %v130
    %v1169 = vadd.f32 %v1162, %v1166
    %v1170 = vadd.f32 %v1163, %v1167
    %v1171 = vadd.f32 %v1164, %v1168
    %1175 = vrot.lane.b32.xlu0 %v1169, 60
    %v1176 = vpop.permute.xlu0 %1175
    %1177 = vrot.lane.b32.xlu0 %v1170, 60
    %v1178 = vpop.permute.xlu0 %1177
    %1179 = vrot.lane.b32.xlu0 %v1171, 60
    %v1180 = vpop.permute.xlu0 %1179
    %vm1181 = vcmask 490496
    %v1182 = vsel %vm1181, %v1176, %v1178
    %v1183 = vsel %vm1181, %v1178, %v1180
    %v1186 = vsel %vm302, %v1182, 0.0
    %v1187 = vsel %vm303, %v1183, 0.0
    %v1188 = vadd.f32 %v1157, %v1186
    %v1189 = vadd.f32 %v1158, %v1187
    %s1190 = sld [smem:[#allocation3 + $0x21]]
    %s1191 = sld [smem:[#allocation3 + $0x52]]
    %v1192 = vstv %s1190
    %v1193 = vmul.f32 %v1192, %v113
    %v1194 = vmul.f32 %v1192, %v109
    %v1195 = vmul.f32 %v1192, %v114
    %v1196 = vstv %s1191
    %v1197 = vmul.f32 %v1196, %v129
    %v1198 = vmul.f32 %v1196, %v125
    %v1199 = vmul.f32 %v1196, %v130
    %v1200 = vadd.f32 %v1193, %v1197
    %v1201 = vadd.f32 %v1194, %v1198
    %v1202 = vadd.f32 %v1195, %v1199
    %1206 = vrot.lane.b32.xlu0 %v1200, 59
    %v1207 = vpop.permute.xlu0 %1206
    %1208 = vrot.lane.b32.xlu0 %v1201, 59
    %v1209 = vpop.permute.xlu0 %1208
    %1210 = vrot.lane.b32.xlu0 %v1202, 59
    %v1211 = vpop.permute.xlu0 %1210
    %vm1212 = vcmask 482304
    %v1213 = vsel %vm1212, %v1207, %v1209
    %v1214 = vsel %vm1212, %v1209, %v1211
    %v1217 = vsel %vm337, %v1213, 0.0
    %v1218 = vsel %vm338, %v1214, 0.0
    %v1219 = vadd.f32 %v1188, %v1217
    %v1220 = vadd.f32 %v1189, %v1218
    %s1221 = sld [smem:[#allocation3 + $0x22]]
    %s1222 = sld [smem:[#allocation3 + $0x53]]
    %v1223 = vstv %s1221
    %v1224 = vmul.f32 %v1223, %v113
    %v1225 = vmul.f32 %v1223, %v109
    %v1226 = vmul.f32 %v1223, %v114
    %v1227 = vstv %s1222
    %v1228 = vmul.f32 %v1227, %v129
    %v1229 = vmul.f32 %v1227, %v125
    %v1230 = vmul.f32 %v1227, %v130
    %v1231 = vadd.f32 %v1224, %v1228
    %v1232 = vadd.f32 %v1225, %v1229
    %v1233 = vadd.f32 %v1226, %v1230
    %1237 = vrot.lane.b32.xlu0 %v1231, 58
    %v1238 = vpop.permute.xlu0 %1237
    %1239 = vrot.lane.b32.xlu0 %v1232, 58
    %v1240 = vpop.permute.xlu0 %1239
    %1241 = vrot.lane.b32.xlu0 %v1233, 58
    %v1242 = vpop.permute.xlu0 %1241
    %vm1243 = vcmask 474112
    %v1244 = vsel %vm1243, %v1238, %v1240
    %v1245 = vsel %vm1243, %v1240, %v1242
    %v1248 = vsel %vm372, %v1244, 0.0
    %v1249 = vsel %vm373, %v1245, 0.0
    %v1250 = vadd.f32 %v1219, %v1248
    %v1251 = vadd.f32 %v1220, %v1249
    %s1252 = sld [smem:[#allocation3 + $0x23]]
    %s1253 = sld [smem:[#allocation3 + $0x54]]
    %v1254 = vstv %s1252
    %v1255 = vmul.f32 %v1254, %v113
    %v1256 = vmul.f32 %v1254, %v109
    %v1257 = vmul.f32 %v1254, %v114
    %v1258 = vstv %s1253
    %v1259 = vmul.f32 %v1258, %v129
    %v1260 = vmul.f32 %v1258, %v125
    %v1261 = vmul.f32 %v1258, %v130
    %v1262 = vadd.f32 %v1255, %v1259
    %v1263 = vadd.f32 %v1256, %v1260
    %v1264 = vadd.f32 %v1257, %v1261
    %1268 = vrot.lane.b32.xlu0 %v1262, 48
    %v1269 = vpop.permute.xlu0 %1268
    %1270 = vrot.lane.b32.xlu0 %v1263, 48
    %v1271 = vpop.permute.xlu0 %1270
    %1272 = vrot.lane.b32.xlu0 %v1264, 48
    %v1273 = vpop.permute.xlu0 %1272
    %vm1274 = vcmask 392192
    %v1275 = vsel %vm1274, %v1269, %v1271
    %v1276 = vsel %vm1274, %v1271, %v1273
    %v1279 = vsel %vm182, %v1275, 0.0
    %v1280 = vsel %vm183, %v1276, 0.0
    %v1281 = vadd.f32 %v1250, %v1279
    %v1282 = vadd.f32 %v1251, %v1280
    %s1283 = sld [smem:[#allocation3 + $0x24]]
    %s1284 = sld [smem:[#allocation3 + $0x55]]
    %v1285 = vstv %s1283
    %v1286 = vmul.f32 %v1285, %v113
    %v1287 = vmul.f32 %v1285, %v109
    %v1288 = vmul.f32 %v1285, %v114
    %v1289 = vstv %s1284
    %v1290 = vmul.f32 %v1289, %v129
    %v1291 = vmul.f32 %v1289, %v125
    %v1292 = vmul.f32 %v1289, %v130
    %v1293 = vadd.f32 %v1286, %v1290
    %v1294 = vadd.f32 %v1287, %v1291
    %v1295 = vadd.f32 %v1288, %v1292
    %1299 = vrot.lane.b32.xlu0 %v1293, 47
    %v1300 = vpop.permute.xlu0 %1299
    %1301 = vrot.lane.b32.xlu0 %v1294, 47
    %v1302 = vpop.permute.xlu0 %1301
    %1303 = vrot.lane.b32.xlu0 %v1295, 47
    %v1304 = vpop.permute.xlu0 %1303
    %vm1305 = vcmask 384000
    %v1306 = vsel %vm1305, %v1300, %v1302
    %v1307 = vsel %vm1305, %v1302, %v1304
    %v1310 = vsel %vm203, %v1306, 0.0
    %v1311 = vsel %vm204, %v1307, 0.0
    %v1312 = vadd.f32 %v1281, %v1310
    %v1313 = vadd.f32 %v1282, %v1311
    %s1314 = sld [smem:[#allocation3 + $0x25]]
    %s1315 = sld [smem:[#allocation3 + $0x56]]
    %v1316 = vstv %s1314
    %v1317 = vmul.f32 %v1316, %v113
    %v1318 = vmul.f32 %v1316, %v109
    %v1319 = vmul.f32 %v1316, %v114
    %v1320 = vstv %s1315
    %v1321 = vmul.f32 %v1320, %v129
    %v1322 = vmul.f32 %v1320, %v125
    %v1323 = vmul.f32 %v1320, %v130
    %v1324 = vadd.f32 %v1317, %v1321
    %v1325 = vadd.f32 %v1318, %v1322
    %v1326 = vadd.f32 %v1319, %v1323
    %1330 = vrot.lane.b32.xlu0 %v1324, 46
    %v1331 = vpop.permute.xlu0 %1330
    %1332 = vrot.lane.b32.xlu0 %v1325, 46
    %v1333 = vpop.permute.xlu0 %1332
    %1334 = vrot.lane.b32.xlu0 %v1326, 46
    %v1335 = vpop.permute.xlu0 %1334
    %vm1336 = vcmask 375808
    %v1337 = vsel %vm1336, %v1331, %v1333
    %v1338 = vsel %vm1336, %v1333, %v1335
    %v1341 = vsel %vm238, %v1337, 0.0
    %v1342 = vsel %vm239, %v1338, 0.0
    %v1343 = vadd.f32 %v1312, %v1341
    %v1344 = vadd.f32 %v1313, %v1342
    %s1345 = sld [smem:[#allocation3 + $0x26]]
    %s1346 = sld [smem:[#allocation3 + $0x57]]
    %v1347 = vstv %s1345
    %v1348 = vmul.f32 %v1347, %v113
    %v1349 = vmul.f32 %v1347, %v109
    %v1350 = vmul.f32 %v1347, %v114
    %v1351 = vstv %s1346
    %v1352 = vmul.f32 %v1351, %v129
    %v1353 = vmul.f32 %v1351, %v125
    %v1354 = vmul.f32 %v1351, %v130
    %v1355 = vadd.f32 %v1348, %v1352
    %v1356 = vadd.f32 %v1349, %v1353
    %v1357 = vadd.f32 %v1350, %v1354
    %1361 = vrot.lane.b32.xlu0 %v1355, 45
    %v1362 = vpop.permute.xlu0 %1361
    %1363 = vrot.lane.b32.xlu0 %v1356, 45
    %v1364 = vpop.permute.xlu0 %1363
    %1365 = vrot.lane.b32.xlu0 %v1357, 45
    %v1366 = vpop.permute.xlu0 %1365
    %vm1367 = vcmask 367616
    %v1368 = vsel %vm1367, %v1362, %v1364
    %v1369 = vsel %vm1367, %v1364, %v1366
    %v1372 = vadd.f32 %v1343, %v1368
    %v1373 = vadd.f32 %v1344, %v1369
    %s1374 = sld [smem:[#allocation3 + $0x27]]
    %s1375 = sld [smem:[#allocation3 + $0x58]]
    %v1376 = vstv %s1374
    %v1377 = vmul.f32 %v1376, %v113
    %v1378 = vmul.f32 %v1376, %v109
    %v1379 = vmul.f32 %v1376, %v114
    %v1380 = vstv %s1375
    %v1381 = vmul.f32 %v1380, %v129
    %v1382 = vmul.f32 %v1380, %v125
    %v1383 = vmul.f32 %v1380, %v130
    %v1384 = vadd.f32 %v1377, %v1381
    %v1385 = vadd.f32 %v1378, %v1382
    %v1386 = vadd.f32 %v1379, %v1383
    %1390 = vrot.lane.b32.xlu0 %v1384, 44
    %v1391 = vpop.permute.xlu0 %1390
    %1392 = vrot.lane.b32.xlu0 %v1385, 44
    %v1393 = vpop.permute.xlu0 %1392
    %1394 = vrot.lane.b32.xlu0 %v1386, 44
    %v1395 = vpop.permute.xlu0 %1394
    %vm1396 = vcmask 359424
    %v1397 = vsel %vm1396, %v1391, %v1393
    %v1398 = vsel %vm1396, %v1393, %v1395
    %v1401 = vsel %vm302, %v1397, 0.0
    %v1402 = vsel %vm303, %v1398, 0.0
    %v1403 = vadd.f32 %v1372, %v1401
    %v1404 = vadd.f32 %v1373, %v1402
    %s1405 = sld [smem:[#allocation3 + $0x28]]
    %s1406 = sld [smem:[#allocation3 + $0x59]]
    %v1407 = vstv %s1405
    %v1408 = vmul.f32 %v1407, %v113
    %v1409 = vmul.f32 %v1407, %v109
    %v1410 = vmul.f32 %v1407, %v114
    %v1411 = vstv %s1406
    %v1412 = vmul.f32 %v1411, %v129
    %v1413 = vmul.f32 %v1411, %v125
    %v1414 = vmul.f32 %v1411, %v130
    %v1415 = vadd.f32 %v1408, %v1412
    %v1416 = vadd.f32 %v1409, %v1413
    %v1417 = vadd.f32 %v1410, %v1414
    %1421 = vrot.lane.b32.xlu0 %v1415, 43
    %v1422 = vpop.permute.xlu0 %1421
    %1423 = vrot.lane.b32.xlu0 %v1416, 43
    %v1424 = vpop.permute.xlu0 %1423
    %1425 = vrot.lane.b32.xlu0 %v1417, 43
    %v1426 = vpop.permute.xlu0 %1425
    %vm1427 = vcmask 351232
    %v1428 = vsel %vm1427, %v1422, %v1424
    %v1429 = vsel %vm1427, %v1424, %v1426
    %v1432 = vsel %vm337, %v1428, 0.0
    %v1433 = vsel %vm338, %v1429, 0.0
    %v1434 = vadd.f32 %v1403, %v1432
    %v1435 = vadd.f32 %v1404, %v1433
    %s1436 = sld [smem:[#allocation3 + $0x29]]
    %s1437 = sld [smem:[#allocation3 + $0x5a]]
    %v1438 = vstv %s1436
    %v1439 = vmul.f32 %v1438, %v113
    %v1440 = vmul.f32 %v1438, %v109
    %v1441 = vmul.f32 %v1438, %v114
    %v1442 = vstv %s1437
    %v1443 = vmul.f32 %v1442, %v129
    %v1444 = vmul.f32 %v1442, %v125
    %v1445 = vmul.f32 %v1442, %v130
    %v1446 = vadd.f32 %v1439, %v1443
    %v1447 = vadd.f32 %v1440, %v1444
    %v1448 = vadd.f32 %v1441, %v1445
    %1452 = vrot.lane.b32.xlu0 %v1446, 42
    %v1453 = vpop.permute.xlu0 %1452
    %1454 = vrot.lane.b32.xlu0 %v1447, 42
    %v1455 = vpop.permute.xlu0 %1454
    %1456 = vrot.lane.b32.xlu0 %v1448, 42
    %v1457 = vpop.permute.xlu0 %1456
    %vm1458 = vcmask 343040
    %v1459 = vsel %vm1458, %v1453, %v1455
    %v1460 = vsel %vm1458, %v1455, %v1457
    %v1463 = vsel %vm372, %v1459, 0.0
    %v1464 = vsel %vm373, %v1460, 0.0
    %v1465 = vadd.f32 %v1434, %v1463
    %v1466 = vadd.f32 %v1435, %v1464
    %s1467 = sld [smem:[#allocation3 + $0x2a]]
    %s1468 = sld [smem:[#allocation3 + $0x5b]]
    %v1469 = vstv %s1467
    %v1470 = vmul.f32 %v1469, %v113
    %v1471 = vmul.f32 %v1469, %v109
    %v1472 = vmul.f32 %v1469, %v114
    %v1473 = vstv %s1468
    %v1474 = vmul.f32 %v1473, %v129
    %v1475 = vmul.f32 %v1473, %v125
    %v1476 = vmul.f32 %v1473, %v130
    %v1477 = vadd.f32 %v1470, %v1474
    %v1478 = vadd.f32 %v1471, %v1475
    %v1479 = vadd.f32 %v1472, %v1476
    %1483 = vrot.lane.b32.xlu0 %v1477, 32
    %v1484 = vpop.permute.xlu0 %1483
    %1485 = vrot.lane.b32.xlu0 %v1478, 32
    %v1486 = vpop.permute.xlu0 %1485
    %1487 = vrot.lane.b32.xlu0 %v1479, 32
    %v1488 = vpop.permute.xlu0 %1487
    %vm1489 = vcmask 261120
    %v1490 = vsel %vm1489, %v1484, %v1486
    %v1491 = vsel %vm1489, %v1486, %v1488
    %v1494 = vsel %vm182, %v1490, 0.0
    %v1495 = vsel %vm183, %v1491, 0.0
    %v1496 = vadd.f32 %v1465, %v1494
    %v1497 = vadd.f32 %v1466, %v1495
    %s1498 = sld [smem:[#allocation3 + $0x2b]]
    %s1499 = sld [smem:[#allocation3 + $0x5c]]
    %v1500 = vstv %s1498
    %v1501 = vmul.f32 %v1500, %v113
    %v1502 = vmul.f32 %v1500, %v109
    %v1503 = vmul.f32 %v1500, %v114
    %v1504 = vstv %s1499
    %v1505 = vmul.f32 %v1504, %v129
    %v1506 = vmul.f32 %v1504, %v125
    %v1507 = vmul.f32 %v1504, %v130
    %v1508 = vadd.f32 %v1501, %v1505
    %v1509 = vadd.f32 %v1502, %v1506
    %v1510 = vadd.f32 %v1503, %v1507
    %1514 = vrot.lane.b32.xlu0 %v1508, 31
    %v1515 = vpop.permute.xlu0 %1514
    %1516 = vrot.lane.b32.xlu0 %v1509, 31
    %v1517 = vpop.permute.xlu0 %1516
    %1518 = vrot.lane.b32.xlu0 %v1510, 31
    %v1519 = vpop.permute.xlu0 %1518
    %vm1520 = vcmask 252928
    %v1521 = vsel %vm1520, %v1515, %v1517
    %v1522 = vsel %vm1520, %v1517, %v1519
    %v1525 = vsel %vm203, %v1521, 0.0
    %v1526 = vsel %vm204, %v1522, 0.0
    %v1527 = vadd.f32 %v1496, %v1525
    %v1528 = vadd.f32 %v1497, %v1526
    %s1529 = sld [smem:[#allocation3 + $0x2c]]
    %s1530 = sld [smem:[#allocation3 + $0x5d]]
    %v1531 = vstv %s1529
    %v1532 = vmul.f32 %v1531, %v113
    %v1533 = vmul.f32 %v1531, %v109
    %v1534 = vmul.f32 %v1531, %v114
    %v1535 = vstv %s1530
    %v1536 = vmul.f32 %v1535, %v129
    %v1537 = vmul.f32 %v1535, %v125
    %v1538 = vmul.f32 %v1535, %v130
    %v1539 = vadd.f32 %v1532, %v1536
    %v1540 = vadd.f32 %v1533, %v1537
    %v1541 = vadd.f32 %v1534, %v1538
    %1545 = vrot.lane.b32.xlu0 %v1539, 30
    %v1546 = vpop.permute.xlu0 %1545
    %1547 = vrot.lane.b32.xlu0 %v1540, 30
    %v1548 = vpop.permute.xlu0 %1547
    %1549 = vrot.lane.b32.xlu0 %v1541, 30
    %v1550 = vpop.permute.xlu0 %1549
    %vm1551 = vcmask 244736
    %v1552 = vsel %vm1551, %v1546, %v1548
    %v1553 = vsel %vm1551, %v1548, %v1550
    %v1556 = vsel %vm238, %v1552, 0.0
    %v1557 = vsel %vm239, %v1553, 0.0
    %v1558 = vadd.f32 %v1527, %v1556
    %v1559 = vadd.f32 %v1528, %v1557
    %s1560 = sld [smem:[#allocation3 + $0x2d]]
    %s1561 = sld [smem:[#allocation3 + $0x5e]]
    %v1562 = vstv %s1560
    %v1563 = vmul.f32 %v1562, %v113
    %v1564 = vmul.f32 %v1562, %v109
    %v1565 = vmul.f32 %v1562, %v114
    %v1566 = vstv %s1561
    %v1567 = vmul.f32 %v1566, %v129
    %v1568 = vmul.f32 %v1566, %v125
    %v1569 = vmul.f32 %v1566, %v130
    %v1570 = vadd.f32 %v1563, %v1567
    %v1571 = vadd.f32 %v1564, %v1568
    %v1572 = vadd.f32 %v1565, %v1569
    %1576 = vrot.lane.b32.xlu0 %v1570, 29
    %v1577 = vpop.permute.xlu0 %1576
    %1578 = vrot.lane.b32.xlu0 %v1571, 29
    %v1579 = vpop.permute.xlu0 %1578
    %1580 = vrot.lane.b32.xlu0 %v1572, 29
    %v1581 = vpop.permute.xlu0 %1580
    %vm1582 = vcmask 236544
    %v1583 = vsel %vm1582, %v1577, %v1579
    %v1584 = vsel %vm1582, %v1579, %v1581
    %v1587 = vadd.f32 %v1558, %v1583
    %v1588 = vadd.f32 %v1559, %v1584
    %s1589 = sld [smem:[#allocation3 + $0x2e]]
    %s1590 = sld [smem:[#allocation3 + $0x5f]]
    %v1591 = vstv %s1589
    %v1592 = vmul.f32 %v1591, %v113
    %v1593 = vmul.f32 %v1591, %v109
    %v1594 = vmul.f32 %v1591, %v114
    %v1595 = vstv %s1590
    %v1596 = vmul.f32 %v1595, %v129
    %v1597 = vmul.f32 %v1595, %v125
    %v1598 = vmul.f32 %v1595, %v130
    %v1599 = vadd.f32 %v1592, %v1596
    %v1600 = vadd.f32 %v1593, %v1597
    %v1601 = vadd.f32 %v1594, %v1598
    %1605 = vrot.lane.b32.xlu0 %v1599, 28
    %v1606 = vpop.permute.xlu0 %1605
    %1607 = vrot.lane.b32.xlu0 %v1600, 28
    %v1608 = vpop.permute.xlu0 %1607
    %1609 = vrot.lane.b32.xlu0 %v1601, 28
    %v1610 = vpop.permute.xlu0 %1609
    %vm1611 = vcmask 228352
    %v1612 = vsel %vm1611, %v1606, %v1608
    %v1613 = vsel %vm1611, %v1608, %v1610
    %v1616 = vsel %vm302, %v1612, 0.0
    %v1617 = vsel %vm303, %v1613, 0.0
    %v1618 = vadd.f32 %v1587, %v1616
    %v1619 = vadd.f32 %v1588, %v1617
    %s1620 = sld [smem:[#allocation3 + $0x2f]]
    %s1621 = sld [smem:[#allocation3 + $0x60]]
    %v1622 = vstv %s1620
    %v1623 = vmul.f32 %v1622, %v113
    %v1624 = vmul.f32 %v1622, %v109
    %v1625 = vmul.f32 %v1622, %v114
    %v1626 = vstv %s1621
    %v1627 = vmul.f32 %v1626, %v129
    %v1628 = vmul.f32 %v1626, %v125
    %v1629 = vmul.f32 %v1626, %v130
    %v1630 = vadd.f32 %v1623, %v1627
    %v1631 = vadd.f32 %v1624, %v1628
    %v1632 = vadd.f32 %v1625, %v1629
    %1636 = vrot.lane.b32.xlu0 %v1630, 27
    %v1637 = vpop.permute.xlu0 %1636
    %1638 = vrot.lane.b32.xlu0 %v1631, 27
    %v1639 = vpop.permute.xlu0 %1638
    %1640 = vrot.lane.b32.xlu0 %v1632, 27
    %v1641 = vpop.permute.xlu0 %1640
    %vm1642 = vcmask 220160
    %v1643 = vsel %vm1642, %v1637, %v1639
    %v1644 = vsel %vm1642, %v1639, %v1641
    %v1647 = vsel %vm337, %v1643, 0.0
    %v1648 = vsel %vm338, %v1644, 0.0
    %v1649 = vadd.f32 %v1618, %v1647
    %v1650 = vadd.f32 %v1619, %v1648
    %s1651 = sld [smem:[#allocation3 + $0x30]]
    %s1652 = sld [smem:[#allocation3 + $0x61]]
    %v1653 = vstv %s1651
    %v1654 = vmul.f32 %v1653, %v113
    %v1655 = vmul.f32 %v1653, %v109
    %v1656 = vmul.f32 %v1653, %v114
    %v1657 = vstv %s1652
    %v1658 = vmul.f32 %v1657, %v129
    %v1659 = vmul.f32 %v1657, %v125
    %v1660 = vmul.f32 %v1657, %v130
    %v1661 = vadd.f32 %v1654, %v1658
    %v1662 = vadd.f32 %v1655, %v1659
    %v1663 = vadd.f32 %v1656, %v1660
    %1667 = vrot.lane.b32.xlu0 %v1661, 26
    %v1668 = vpop.permute.xlu0 %1667
    %1669 = vrot.lane.b32.xlu0 %v1662, 26
    %v1670 = vpop.permute.xlu0 %1669
    %1671 = vrot.lane.b32.xlu0 %v1663, 26
    %v1672 = vpop.permute.xlu0 %1671
    %vm1673 = vcmask 211968
    %v1674 = vsel %vm1673, %v1668, %v1670
    %v1675 = vsel %vm1673, %v1670, %v1672
    %v1678 = vsel %vm372, %v1674, 0.0
    %v1679 = vsel %vm373, %v1675, 0.0
    %v1680 = vadd.f32 %v1649, %v1678
    %v1681 = vadd.f32 %v1650, %v1679
    %s1682 = sld [smem:[#allocation2]]
    %v1683 = vstv %s1682
    %v1684 = vadd.f32 %v1680, %v1683
    %v1685 = vadd.f32 %v1681, %v1683
    %v1686 = vsub.f32 0.0, %v1684
    %v1687 = vsub.f32 0.0, %v1685
    %v1688 = vmul.f32 %v1686, 1.442695
    %v1689 = vpow.pop %v1688
    %v1690 = vmul.f32 %v1687, 1.442695
    %v1691 = vpow.pop %v1690
    %v1692 = vadd.f32 %v1689, 1.0
    %v1693 = vadd.f32 %v1691, 1.0
    %v1694 = vrcp.pop %v1692
    %v1695 = vmul.f32 1.0, %v1694
    %v1696 = vrcp.pop %v1693
    %v1697 = vmul.f32 1.0, %v1696
    %v1700 = vcombine.low %v1695, %v1697
    %v1702 = vunpack.c.l.s4 1966171168
    %v1703 = vunpack.c.0.s8 %v1702
    %v1704 = vlaneseq
    %v1705 = vshrl.u32 %v1704, 7
    %v1706 = vsub.s32 %v1703, %v1705
    %v1707 = vrot.slane %v1700, %v1706
    %v1708 = vcombine.high %v1707, %v1707
    %v1710 = vunpack.c.l.s4 1966171168
    %v1711 = vunpack.c.0.s8 %v1710
    %v1712 = vlaneseq
    %v1713 = vshrl.u32 %v1712, 7
    %v1714 = vsub.s32 %v1711, %v1713
    %v1715 = vrot.slane %v1707, %v1714
    %v1717 = vunpack.c.l.s4 1966171168
    %v1718 = vunpack.c.0.s8 %v1717
    %v1719 = vlaneseq
    %v1720 = vshrl.u32 %v1719, 7
    %v1721 = vsub.s32 %v1718, %v1720
    %v1722 = vrot.slane %v1708, %v1721
    %v1723 = vlaneseq
    %v1724 = vshrl.u32 %v1723, 7
    %v1725 = vsub.s32 0, %v1724
    %v1726 = vrot.slane %v1715, %v1725
    %v1727 = vlaneseq
    %v1728 = vshrl.u32 %v1727, 7
    %v1729 = vsub.s32 1, %v1728
    %v1730 = vrot.slane %v1715, %v1729
    %v1731 = vlaneseq
    %v1732 = vshrl.u32 %v1731, 7
    %v1733 = vsub.s32 0, %v1732
    %v1734 = vrot.slane %v1722, %v1733
    %v1735 = vlaneseq
    %v1736 = vshrl.u32 %v1735, 7
    %v1737 = vsub.s32 1, %v1736
    %v1738 = vrot.slane %v1722, %v1737
    %v1739 = vcombine.low %v1726, %v1730
    %v1740 = vcombine.low %v1734, %v1738
    %v1743 = vmul.f32 %v28, %v1739
    %v1744 = vmul.f32 %v29, %v1740
    %1745 = vst [vmem:[%s3] sm:$0xff] %v1743
    %1746 = vst [vmem:[%s3 + $0x8] sm:$0xff] %v1744
    // Predicated region
    $region18: #{spatial_gate.1} parent=1 // pred_check
      _
    $region19: #{spatial_gate.1} parent=1 // pred_check_branch
      %1748 = sbr.rel (0) target = $region21
    $region20: #{spatial_gate.1} parent=1 // pred_region
      _
    $region21: #{spatial_gate.1} parent=1 // pred_fallthru
      _
    // Predicated region
    $region22: #{spatial_gate.1} parent=1 // pred_check
      _
    $region23: #{spatial_gate.1} parent=1 // pred_check_branch
      %1750 = sbr.rel (0) target = $region25
    $region24: #{spatial_gate.1} parent=1 // pred_region
      _
    $region25: #{spatial_gate.1} parent=1 // pred_fallthru
      _
    %1751 = vsyncpa [#allocation4], 1

</llo_original>
